<compile_context>
chip_gen: v5e
topology: v5e:2x2
jax: 0.10.0
libtpu: 0.0.40
codegen_flags: <defaults>
</compile_context>

<pallas_src>
import functools

import jax
import jax.numpy as jnp
from jax.experimental import pallas as pl
from jax.experimental.pallas import tpu as pltpu


# ----------------------------------------------------------------------------------
# Generation-aware configuration
# ----------------------------------------------------------------------------------
@functools.lru_cache(maxsize=None)
def _tpu_generation_params():
    """(vmem_limit_bytes, two_tensorcores, bf16_vpu) chosen per TPU generation."""
    kind = ""
    try:
        kind = jax.devices()[0].device_kind.lower()
    except Exception:
        pass
    is_v7 = "v7" in kind
    # v7x: 64 MiB physical VMEM per TC -> cap at 52 MiB (headroom for Pallas double
    # buffers + Mosaic internal scratch).  v5e / v6e: 128 MiB -> 104 MiB.
    vmem_limit = (52 if is_v7 else 104) * 1024 * 1024
    # Only v7x (and v4 megacore) have a second TensorCore worth sharding the batch
    # over; on v5e/v6e splitting the batch only halves MXU row utilization per step.
    two_tc = is_v7 or ("v4" in kind)
    # bf16 VALUs exist on v6e / v7x; v5e keeps the elementwise chain in f32.
    bf16_vpu = ("v6" in kind) or is_v7
    return vmem_limit, two_tc, bf16_vpu


def _single_buffer_kwargs(enabled):
    """pipeline_mode=pl.Buffered(1) kwargs for grid-invariant inputs, if supported."""
    if not enabled:
        return {}
    buffered = getattr(pl, "Buffered", None)
    if buffered is None:
        return {}
    try:
        pl.BlockSpec((8, 128), lambda i, j: (0, 0), pipeline_mode=buffered(1))
    except Exception:
        return {}
    return {"pipeline_mode": buffered(1)}


# ----------------------------------------------------------------------------------
# Recurrent per-timestep kernel
# ----------------------------------------------------------------------------------
def _make_decoder_step_kernel(attn_dim, enc_dim, dec_dim, chain_dtype):
    A, E, D = attn_dim, enc_dim, dec_dim

    def decoder_step_kernel(
        # grid-invariant inputs (single-buffered)
        enc_ref,      # (Bt, P, E)   bf16   encoder output chunk (resident)
        att1_ref,     # (Bt, P, A)   bf16   encoder_att(enc), t-invariant
        h0_ref,       # (Bt, D)      f32    init_h(mean(enc))
        c0_ref,       # (Bt, D)      f32    init_c(mean(enc))
        # per-timestep input
        gate_e_ref,   # (1, Bt, 4D)  f32    emb_t @ W_ih_emb + (b_ih + b_hh), hoisted
        # fused weights
        w_h_ref,      # (D, A+E+4D)  bf16   [decoder_att | beta_layer | W_hh]
        b_h_ref,      # (1, A+E+4D)  f32    [b_da | b_beta | 0]
        w_ia_ref,     # (E, 4D)      bf16   LSTM W_ih (awe input slice)
        w_fa_ref,     # (1, A)       f32    full_att weight (VPU lane reduction)
        b_fa_ref,     # (1, 1)       f32
        # outputs
        h_out_ref,    # (1, Bt, D)   bf16   hidden state at step t (fc deferred)
        scores_ref,   # (1, Bt, P)   f32    attention scores at step t
        # scratch (persists across the sequential time axis)
        h_sc, c_sc,   # (Bt, D) f32
    ):
        t = pl.program_id(1)

        # ---- t == 0: load the precomputed initial state (init hoisted to wrapper) ----
        @pl.when(t == 0)
        def _init():
            h_sc[...] = h0_ref[...]
            c_sc[...] = c0_ref[...]

        h = h_sc[...]
        c = c_sc[...]
        h_bf = h.astype(jnp.bfloat16)

        # ---- single fused h-projection: [att2 | beta_pre | gates_h] ----
        hp = (jnp.dot(h_bf, w_h_ref[...], preferred_element_type=jnp.float32)
              + b_h_ref[...])                                   # (Bt, A+E+4D) f32
        att2 = hp[:, :A]                                        # decoder_att(h)
        beta_pre = hp[:, A:A + E]                               # beta_layer(h) pre-act
        gates_h = hp[:, A + E:]                                 # h @ W_hh

        # ---- attention scoring chain (bf16 on bf16-VALU chips, f32 accumulation) ----
        s = jnp.maximum(att1_ref[...].astype(chain_dtype)
                        + att2.astype(chain_dtype)[:, None, :], 0)          # (Bt, P, A)
        att = (jnp.sum(s * w_fa_ref[...].astype(chain_dtype), axis=-1,
                       dtype=jnp.float32)
               + b_fa_ref[...])                                              # (Bt, P) f32
        att = att - jnp.max(att, axis=-1, keepdims=True)                     # stable softmax
        e = jnp.exp(att)
        # exact reciprocal: the scores feed the doubly-stochastic regularizer.
        scores = e * pl.reciprocal(jnp.sum(e, axis=-1, keepdims=True), approx=False)

        # ---- attention-weighted encoding: VPU multiply + f32 pixel reduction ----
        awe = jnp.sum(enc_ref[...].astype(chain_dtype)
                      * scores.astype(chain_dtype)[:, :, None],
                      axis=1, dtype=jnp.float32)                             # (Bt, E) f32

        gate = jax.nn.sigmoid(beta_pre)                                      # (Bt, E)
        awe = gate * awe

        # ---- LSTM cell (PyTorch gate order i, f, g, o); emb term precomputed ----
        gates = (gate_e_ref[0] + gates_h
                 + jnp.dot(awe.astype(jnp.bfloat16), w_ia_ref[...],
                           preferred_element_type=jnp.float32))              # (Bt, 4D)
        i_g = jax.nn.sigmoid(gates[:, 0 * D:1 * D])
        f_g = jax.nn.sigmoid(gates[:, 1 * D:2 * D])
        g_g = jnp.tanh(gates[:, 2 * D:3 * D])
        o_g = jax.nn.sigmoid(gates[:, 3 * D:4 * D])
        c_new = f_g * c + i_g * g_g
        h_new = o_g * jnp.tanh(c_new)
        h_sc[...] = h_new
        c_sc[...] = c_new

        # TODO(synk): dropout before fc treated as identity (inference mode); training
        #             dropout would use pltpu.prng_seed / pltpu.prng_random_bits.
        h_out_ref[0] = h_new.astype(h_out_ref.dtype)
        scores_ref[0] = scores

    return decoder_step_kernel


# ----------------------------------------------------------------------------------
# Deferred fc head: batched (rows, D) x (D, V) matmul, vocab-tiled
# ----------------------------------------------------------------------------------
def fc_head_kernel(h_ref, w_ref, b_ref, o_ref):
    o_ref[...] = (jnp.dot(h_ref[...], w_ref[...], preferred_element_type=jnp.float32)
                  + b_ref[...]).astype(o_ref.dtype)


# ----------------------------------------------------------------------------------
# Parameters (synthetic, mirroring Decoder.__init__ shapes; stored pre-transposed)
# ----------------------------------------------------------------------------------
def make_params(key, vocab_size, embedding_dim, encoder_dim, decoder_dim, attention_dim):
    ks = jax.random.split(key, 16)
    u = lambda k, shape, s: jax.random.uniform(k, shape, jnp.float32, -s, s)
    D4 = 4 * decoder_dim
    return {
        "embedding": u(ks[0], (vocab_size, embedding_dim), 0.1),     # uniform_(-0.1, 0.1)
        # LSTMCell(embedding_dim + encoder_dim, decoder_dim), split by input stream
        "w_ih_e":   u(ks[1], (embedding_dim, D4), 0.08),
        "w_ih_a":   u(ks[2], (encoder_dim, D4), 0.08),
        "w_hh":     u(ks[3], (decoder_dim, D4), 0.08),
        "b_lstm":   u(ks[4], (1, D4), 0.08),                         # b_ih + b_hh fused
        # Attention
        "w_ea":     u(ks[5], (encoder_dim, attention_dim), 0.05),
        "b_ea":     u(ks[6], (1, attention_dim), 0.05),
        "w_da":     u(ks[7], (decoder_dim, attention_dim), 0.05),
        "b_da":     u(ks[8], (1, attention_dim), 0.05),
        "w_fa":     u(ks[9], (1, attention_dim), 0.05),              # full_att.weight (1, A)
        "b_fa":     u(ks[10], (1, 1), 0.05),
        # beta gate
        "w_beta":   u(ks[11], (decoder_dim, encoder_dim), 0.05),
        "b_beta":   u(ks[12], (1, encoder_dim), 0.05),
        # init_h / init_c
        "w_inith":  u(ks[13], (encoder_dim, decoder_dim), 0.05),
        "b_inith":  jnp.zeros((1, decoder_dim), jnp.float32),
        "w_initc":  u(ks[14], (encoder_dim, decoder_dim), 0.05),
        "b_initc":  jnp.zeros((1, decoder_dim), jnp.float32),
        # fc head (init_weights: weight uniform_(-0.1, 0.1), bias 0)
        "w_fc":     u(ks[15], (decoder_dim, vocab_size), 0.1),
        "b_fc":     jnp.zeros((1, vocab_size), jnp.float32),
    }


def _pick_batch_tile(batch, two_tc):
    # 2-way batch split only where a second TensorCore exists and the half-chunk
    # keeps an (8, .)-aligned sublane block; single TC chips keep the full batch.
    if two_tc and batch % 2 == 0 and (batch // 2) % 8 == 0:
        return batch // 2
    return batch


def _pick_row_tiling(rows):
    # Pad rows up to a multiple of 128 so the fc head always uses aligned,
    # lane-dense tiles (never one giant (rows, V) block).
    rows_p = ((rows + 127) // 128) * 128
    for cand in (512, 256, 128):
        if rows_p % cand == 0:
            return rows_p, cand
    return rows_p, 128


def _pick_vocab_tile(vocab):
    for cand in (4096, 2048, 1024):
        if vocab % cand == 0:
            return cand
    return vocab


# ----------------------------------------------------------------------------------
# Forward pass
# ----------------------------------------------------------------------------------
@functools.partial(jax.jit, static_argnames=("single_buffer",))
def decoder_forward(params, encoder_output, captions, *, single_buffer=True):
    f32, bf16 = jnp.float32, jnp.bfloat16
    vmem_limit, two_tc, bf16_vpu = _tpu_generation_params()
    chain_dtype = bf16 if bf16_vpu else f32
    inv_kw = _single_buffer_kwargs(single_buffer)

    B = encoder_output.shape[0]
    E = encoder_output.shape[-1]
    enc = encoder_output.reshape(B, -1, E).astype(f32)       # view(B, -1, E)
    P = enc.shape[1]
    T = captions.shape[1]
    D = params["w_hh"].shape[0]
    A = params["w_ea"].shape[1]
    V = params["w_fc"].shape[1]
    D4 = 4 * D

    # ---- one-time work hoisted out of the recurrent kernel ----
    mean_enc = jnp.mean(enc, axis=1)                          # (B, E)
    h0 = mean_enc @ params["w_inith"] + params["b_inith"]     # (B, D) f32
    c0 = mean_enc @ params["w_initc"] + params["b_initc"]     # (B, D) f32
    # t-invariant encoder_att projection, stored bf16 (halves its VMEM residency)
    att1 = (jnp.einsum("bpe,ea->bpa", enc, params["w_ea"]) + params["b_ea"]).astype(bf16)

    emb = jnp.take(params["embedding"], captions, axis=0)     # (B, T, M) embedding lookup
    emb_tm = jnp.transpose(emb, (1, 0, 2))                    # (T, B, M) time-major
    # Embedding contribution to the LSTM gates is h-independent -> precompute for all t.
    gates_e = (jnp.einsum("tbm,mg->tbg", emb_tm.astype(bf16),
                          params["w_ih_e"].astype(bf16),
                          preferred_element_type=f32)
               + params["b_lstm"])                            # (T, B, 4D) f32

    # Fused per-step weights (wrapper-side concat; no in-kernel concatenation needed).
    w_h_all = jnp.concatenate(
        [params["w_da"], params["w_beta"], params["w_hh"]], axis=1).astype(bf16)
    b_h_all = jnp.concatenate(
        [params["b_da"], params["b_beta"], jnp.zeros((1, D4), f32)], axis=1).astype(f32)

    enc_bf = enc.astype(bf16)                                 # bf16 MXU/VPU operand

    weights = [
        w_h_all,                                              # (D, A+E+4D) bf16
        b_h_all,                                              # (1, A+E+4D) f32
        params["w_ih_a"].astype(bf16),                        # (E, 4D)     bf16
        params["w_fa"].astype(f32),                           # (1, A)      f32
        params["b_fa"].astype(f32),                           # (1, 1)      f32
    ]

    Bt = _pick_batch_tile(B, two_tc)
    n_b = B // Bt

    def invariant_spec(block, index_map):
        return pl.BlockSpec(block, index_map, **inv_kw)

    def weight_spec(arr):
        nd = arr.ndim
        return pl.BlockSpec(arr.shape, lambda b, t, _nd=nd: (0,) * _nd, **inv_kw)

    in_specs = [
        invariant_spec((Bt, P, E), lambda b, t: (b, 0, 0)),   # encoder block
        invariant_spec((Bt, P, A), lambda b, t: (b, 0, 0)),   # encoder_att projection
        invariant_spec((Bt, D), lambda b, t: (b, 0)),         # h0
        invariant_spec((Bt, D), lambda b, t: (b, 0)),         # c0
        pl.BlockSpec((1, Bt, D4), lambda b, t: (t, b, 0)),    # per-step emb-gates slab
    ] + [weight_spec(w) for w in weights]

    grid_spec = pltpu.PrefetchScalarGridSpec(
        num_scalar_prefetch=0,
        grid=(n_b, T),
        in_specs=in_specs,
        out_specs=[
            pl.BlockSpec((1, Bt, D), lambda b, t: (t, b, 0)),
            pl.BlockSpec((1, Bt, P), lambda b, t: (t, b, 0)),
        ],
        scratch_shapes=[
            pltpu.VMEM((Bt, D), jnp.float32),     # h
            pltpu.VMEM((Bt, D), jnp.float32),     # c
        ],
    )

    h_tbd, scores_tbp = pl.pallas_call(
        _make_decoder_step_kernel(A, E, D, chain_dtype),
        grid_spec=grid_spec,
        out_shape=(
            jax.ShapeDtypeStruct((T, B, D), bf16),            # bf16 writeback (halved)
            jax.ShapeDtypeStruct((T, B, P), f32),
        ),
        compiler_params=pltpu.CompilerParams(
            dimension_semantics=("parallel", "arbitrary"),    # batch chunks ∥, time sequential
            vmem_limit_bytes=vmem_limit,
        ),
    )(enc_bf, att1, h0, c0, gates_e, *weights)

    # ---- deferred fc head: consume h in batch-major order so the big (B,T,V) output
    #      needs no post-hoc transpose (only the small (T,B,D) bf16 tensor is permuted).
    rows = B * T
    rows_p, tr = _pick_row_tiling(rows)
    tn = _pick_vocab_tile(V)
    n_v = V // tn

    h_flat = jnp.transpose(h_tbd, (1, 0, 2)).reshape(rows, D)        # (B*T, D) bf16
    if rows_p != rows:
        h_flat = jnp.pad(h_flat, ((0, rows_p - rows), (0, 0)))

    w_kw = inv_kw if n_v == 1 else {}
    preds_flat = pl.pallas_call(
        fc_head_kernel,
        grid_spec=pltpu.PrefetchScalarGridSpec(
            num_scalar_prefetch=0,
            grid=(rows_p // tr, n_v),
            in_specs=[
                pl.BlockSpec((tr, D), lambda i, j: (i, 0)),
                pl.BlockSpec((D, tn), lambda i, j: (0, j), **w_kw),
                pl.BlockSpec((1, tn), lambda i, j: (0, j), **w_kw),
            ],
            out_specs=pl.BlockSpec((tr, tn), lambda i, j: (i, j)),
        ),
        out_shape=jax.ShapeDtypeStruct((rows_p, V), f32),
        compiler_params=pltpu.CompilerParams(
            dimension_semantics=("parallel", "parallel"),
            vmem_limit_bytes=vmem_limit,
        ),
    )(h_flat, params["w_fc"].astype(bf16), params["b_fc"].astype(f32))

    predictions = preds_flat[:rows].reshape(B, T, V)                  # already batch-major
    all_attention_scores = jnp.transpose(scores_tbp, (1, 0, 2))       # (B, T, P) -- small
    return predictions, captions, all_attention_scores


if __name__ == "__main__":
    # Small config consistent with the module.
    VOCAB = 64
    EMB_DIM = 16
    ENC_DIM = 32     # encoder_dim (2048 in the original, shrunk for the demo)
    DEC_DIM = 32     # config.decoder_dim
    ATT_DIM = 32     # config.attention_dim
    B, Hf, Wf = 2, 4, 4          # encoder feature map -> num_pixels P = 16
    T = 8                        # caption length

    key = jax.random.PRNGKey(0)
    kp, ke, kc = jax.random.split(key, 3)

    params = make_params(kp, VOCAB, EMB_DIM, ENC_DIM, DEC_DIM, ATT_DIM)
    encoder_output = jax.random.normal(ke, (B, Hf, Wf, ENC_DIM), jnp.float32)
    captions = jax.random.randint(kc, (B, T), 0, VOCAB, jnp.int32)

    try:
        outs = decoder_forward(params, encoder_output, captions, single_buffer=True)
        jax.block_until_ready(outs)
    except Exception:
        # Only reached on installs whose BlockSpec lacks pipeline_mode=pl.Buffered(1);
        # identical math (at demo sizes the extra double-buffering is harmless).
        outs = decoder_forward(params, encoder_output, captions, single_buffer=False)
        jax.block_until_ready(outs)

    predictions, caps_out, att_scores = outs

    assert predictions.shape == (B, T, VOCAB)
    assert att_scores.shape == (B, T, Hf * Wf)
    assert caps_out.shape == (B, T)
    # attention scores are a softmax over pixels -> rows sum to ~1 (exact reciprocal)
    assert jnp.allclose(jnp.sum(att_scores, axis=-1), 1.0, atol=1e-3)
    assert bool(jnp.all(jnp.isfinite(predictions)))

    print("KERNEL_OK")
</pallas_src>

<mosaic_0001>
module attributes {stable_mosaic.version = 11 : i64} {
  func.func @fc_head_kernel(%arg0: i32, %arg1: i32, %arg2: memref<128x32xbf16, #tpu.memory_space<vmem>>, %arg3: memref<32x64xbf16, #tpu.memory_space<vmem>>, %arg4: memref<1x64xf32, #tpu.memory_space<vmem>>, %arg5: memref<128x64xf32, #tpu.memory_space<vmem>>) attributes {dimension_semantics = [#tpu.dimension_semantics<parallel>, #tpu.dimension_semantics<parallel>], iteration_bounds = array<i64: 1, 1>, scalar_prefetch = 0 : i64, scratch_operands = 0 : i64, tpu.core_type = #tpu.core_type<tc>, window_params = [{transform_indices = @transform_0, window_bounds = array<i64: 128, 32>}, {pipeline_mode = #tpu.pipeline_mode<synchronous>, transform_indices = @transform_1, window_bounds = array<i64: 32, 64>}, {pipeline_mode = #tpu.pipeline_mode<synchronous>, transform_indices = @transform_2, window_bounds = array<i64: 1, 64>}, {transform_indices = @transform_3, window_bounds = array<i64: 128, 64>}]} {
    %c0 = arith.constant 0 : index
    %c0_0 = arith.constant 0 : index
    %0 = vector.load %arg2[%c0, %c0_0] : memref<128x32xbf16, #tpu.memory_space<vmem>>, vector<128x32xbf16>
    %c0_1 = arith.constant 0 : index
    %c0_2 = arith.constant 0 : index
    %1 = vector.load %arg3[%c0_1, %c0_2] : memref<32x64xbf16, #tpu.memory_space<vmem>>, vector<32x64xbf16>
    %cst = arith.constant dense<0.000000e+00> : vector<128x64xf32>
    %2 = tpu.matmul %0, %1, %cst {dimension_numbers = #tpu.dot_dimension_numbers<[1], [0], [0], [1], [0, 0, 1, 1], [], []>} : vector<128x32xbf16>, vector<32x64xbf16>, vector<128x64xf32> -> vector<128x64xf32>
    %c0_3 = arith.constant 0 : index
    %c0_4 = arith.constant 0 : index
    %3 = vector.load %arg4[%c0_3, %c0_4] : memref<1x64xf32, #tpu.memory_space<vmem>>, vector<1x64xf32>
    %4 = vector.broadcast %3 : vector<1x64xf32> to vector<128x64xf32>
    %5 = arith.addf %2, %4 : vector<128x64xf32>
    %c0_5 = arith.constant 0 : index
    %c0_6 = arith.constant 0 : index
    %6 = vector.load %arg5[%c0_5, %c0_6] : memref<128x64xf32, #tpu.memory_space<vmem>>, vector<128x64xf32>
    tpu.vector_store %arg5[%c0_5, %c0_6], %5 {strides = array<i32>} : memref<128x64xf32, #tpu.memory_space<vmem>>, vector<128x64xf32>,
    return
  }
  func.func @transform_0(%arg0: i32, %arg1: i32) -> (i32, i32) {
    %c0_i32 = arith.constant 0 : i32
    %c0_i32_0 = arith.constant 0 : i32
    return %arg0, %c0_i32 : i32, i32
  }
  func.func @transform_1(%arg0: i32, %arg1: i32) -> (i32, i32) {
    %c0_i32 = arith.constant 0 : i32
    %c0_i32_0 = arith.constant 0 : i32
    return %c0_i32, %arg1 : i32, i32
  }
  func.func @transform_2(%arg0: i32, %arg1: i32) -> (i32, i32) {
    %c0_i32 = arith.constant 0 : i32
    %c0_i32_0 = arith.constant 0 : i32
    return %c0_i32, %arg1 : i32, i32
  }
  func.func @transform_3(%arg0: i32, %arg1: i32) -> (i32, i32) {
    %c0_i32 = arith.constant 0 : i32
    return %arg0, %arg1 : i32, i32
  }
}

module attributes {stable_mosaic.version = 11 : i64} {
  func.func @decoder_step_kernel(%arg0: i32, %arg1: i32, %arg2: memref<2x16x32xbf16, #tpu.memory_space<vmem>>, %arg3: memref<2x16x32xbf16, #tpu.memory_space<vmem>>, %arg4: memref<2x32xf32, #tpu.memory_space<vmem>>, %arg5: memref<2x32xf32, #tpu.memory_space<vmem>>, %arg6: memref<1x2x128xf32, #tpu.memory_space<vmem>>, %arg7: memref<32x192xbf16, #tpu.memory_space<vmem>>, %arg8: memref<1x192xf32, #tpu.memory_space<vmem>>, %arg9: memref<32x128xbf16, #tpu.memory_space<vmem>>, %arg10: memref<1x32xf32, #tpu.memory_space<vmem>>, %arg11: memref<1x1xf32, #tpu.memory_space<vmem>>, %arg12: memref<1x2x32xbf16, #tpu.memory_space<vmem>>, %arg13: memref<1x2x16xf32, #tpu.memory_space<vmem>>, %arg14: memref<2x32xf32, #tpu.memory_space<vmem>>, %arg15: memref<2x32xf32, #tpu.memory_space<vmem>>) attributes {dimension_semantics = [#tpu.dimension_semantics<parallel>, #tpu.dimension_semantics<arbitrary>], iteration_bounds = array<i64: 1, 8>, scalar_prefetch = 0 : i64, scratch_operands = 2 : i64, tpu.core_type = #tpu.core_type<tc>, window_params = [{pipeline_mode = #tpu.pipeline_mode<synchronous>, transform_indices = @transform_0, window_bounds = array<i64: 2, 16, 32>}, {pipeline_mode = #tpu.pipeline_mode<synchronous>, transform_indices = @transform_1, window_bounds = array<i64: 2, 16, 32>}, {pipeline_mode = #tpu.pipeline_mode<synchronous>, transform_indices = @transform_2, window_bounds = array<i64: 2, 32>}, {pipeline_mode = #tpu.pipeline_mode<synchronous>, transform_indices = @transform_3, window_bounds = array<i64: 2, 32>}, {transform_indices = @transform_4, window_bounds = array<i64: 1, 2, 128>}, {pipeline_mode = #tpu.pipeline_mode<synchronous>, transform_indices = @transform_5, window_bounds = array<i64: 32, 192>}, {pipeline_mode = #tpu.pipeline_mode<synchronous>, transform_indices = @transform_6, window_bounds = array<i64: 1, 192>}, {pipeline_mode = #tpu.pipeline_mode<synchronous>, transform_indices = @transform_7, window_bounds = array<i64: 32, 128>}, {pipeline_mode = #tpu.pipeline_mode<synchronous>, transform_indices = @transform_8, window_bounds = array<i64: 1, 32>}, {pipeline_mode = #tpu.pipeline_mode<synchronous>, transform_indices = @transform_9, window_bounds = array<i64: 1, 1>}, {transform_indices = @transform_10, window_bounds = array<i64: 1, 2, 32>}, {transform_indices = @transform_11, window_bounds = array<i64: 1, 2, 16>}]} {
    %c0_i32 = arith.constant 0 : i32
    %0 = arith.cmpi eq, %arg1, %c0_i32 : i32
    %1 = arith.extui %0 : i1 to i32
    %c0_i32_0 = arith.constant 0 : i32
    %2 = arith.cmpi ne, %1, %c0_i32_0 : i32
    scf.if %2 {
      %c0_43 = arith.constant 0 : index
      %c0_44 = arith.constant 0 : index
      %92 = vector.load %arg4[%c0_43, %c0_44] : memref<2x32xf32, #tpu.memory_space<vmem>>, vector<2x32xf32>
      %c0_45 = arith.constant 0 : index
      %c0_46 = arith.constant 0 : index
      %93 = vector.load %arg14[%c0_45, %c0_46] : memref<2x32xf32, #tpu.memory_space<vmem>>, vector<2x32xf32>
      tpu.vector_store %arg14[%c0_45, %c0_46], %92 {strides = array<i32>} : memref<2x32xf32, #tpu.memory_space<vmem>>, vector<2x32xf32>,
      %c0_47 = arith.constant 0 : index
      %c0_48 = arith.constant 0 : index
      %94 = vector.load %arg5[%c0_47, %c0_48] : memref<2x32xf32, #tpu.memory_space<vmem>>, vector<2x32xf32>
      %c0_49 = arith.constant 0 : index
      %c0_50 = arith.constant 0 : index
      %95 = vector.load %arg15[%c0_49, %c0_50] : memref<2x32xf32, #tpu.memory_space<vmem>>, vector<2x32xf32>
      tpu.vector_store %arg15[%c0_49, %c0_50], %94 {strides = array<i32>} : memref<2x32xf32, #tpu.memory_space<vmem>>, vector<2x32xf32>,
    } else {
    }
    %c0 = arith.constant 0 : index
    %c0_1 = arith.constant 0 : index
    %3 = vector.load %arg14[%c0, %c0_1] : memref<2x32xf32, #tpu.memory_space<vmem>>, vector<2x32xf32>
    %c0_2 = arith.constant 0 : index
    %c0_3 = arith.constant 0 : index
    %4 = vector.load %arg15[%c0_2, %c0_3] : memref<2x32xf32, #tpu.memory_space<vmem>>, vector<2x32xf32>
    %5 = arith.truncf %3 : vector<2x32xf32> to vector<2x32xbf16>
    %c0_4 = arith.constant 0 : index
    %c0_5 = arith.constant 0 : index
    %6 = vector.load %arg7[%c0_4, %c0_5] : memref<32x192xbf16, #tpu.memory_space<vmem>>, vector<32x192xbf16>
    %cst = arith.constant dense<0.000000e+00> : vector<2x192xf32>
    %7 = tpu.matmul %5, %6, %cst {dimension_numbers = #tpu.dot_dimension_numbers<[1], [0], [0], [1], [0, 0, 1, 1], [], []>} : vector<2x32xbf16>, vector<32x192xbf16>, vector<2x192xf32> -> vector<2x192xf32>
    %c0_6 = arith.constant 0 : index
    %c0_7 = arith.constant 0 : index
    %8 = vector.load %arg8[%c0_6, %c0_7] : memref<1x192xf32, #tpu.memory_space<vmem>>, vector<1x192xf32>
    %9 = vector.broadcast %8 : vector<1x192xf32> to vector<2x192xf32>
    %10 = arith.addf %7, %9 : vector<2x192xf32>
    %11 = vector.extract_strided_slice %10 {offsets = [0, 0], sizes = [2, 32], strides = [1, 1]} : vector<2x192xf32> to vector<2x32xf32>
    %12 = vector.extract_strided_slice %10 {offsets = [0, 32], sizes = [2, 32], strides = [1, 1]} : vector<2x192xf32> to vector<2x32xf32>
    %13 = vector.extract_strided_slice %10 {offsets = [0, 64], sizes = [2, 128], strides = [1, 1]} : vector<2x192xf32> to vector<2x128xf32>
    %c0_8 = arith.constant 0 : index
    %c0_9 = arith.constant 0 : index
    %c0_10 = arith.constant 0 : index
    %14 = vector.load %arg3[%c0_8, %c0_9, %c0_10] : memref<2x16x32xbf16, #tpu.memory_space<vmem>>, vector<2x16x32xbf16>
    %15 = arith.extf %14 : vector<2x16x32xbf16> to vector<2x16x32xf32>
    %16 = vector.shape_cast %11 : vector<2x32xf32> to vector<2x1x32xf32>
    %17 = vector.broadcast %16 : vector<2x1x32xf32> to vector<2x16x32xf32>
    %18 = arith.addf %15, %17 : vector<2x16x32xf32>
    %cst_11 = arith.constant 0.000000e+00 : f32
    %19 = vector.broadcast %cst_11 : f32 to vector<2x16x32xf32>
    %20 = arith.maximumf %18, %19 : vector<2x16x32xf32>
    %c0_12 = arith.constant 0 : index
    %c0_13 = arith.constant 0 : index
    %21 = vector.load %arg10[%c0_12, %c0_13] : memref<1x32xf32, #tpu.memory_space<vmem>>, vector<1x32xf32>
    %22 = vector.shape_cast %21 : vector<1x32xf32> to vector<1x1x32xf32>
    %23 = vector.broadcast %22 : vector<1x1x32xf32> to vector<2x16x32xf32>
    %24 = arith.mulf %20, %23 : vector<2x16x32xf32>
    %cst_14 = arith.constant dense<0.000000e+00> : vector<2x16xf32>
    %25 = vector.multi_reduction <add>, %24, %cst_14 [2] : vector<2x16x32xf32> to vector<2x16xf32>
    %c0_15 = arith.constant 0 : index
    %c0_16 = arith.constant 0 : index
    %26 = vector.load %arg11[%c0_15, %c0_16] : memref<1x1xf32, #tpu.memory_space<vmem>>, vector<1x1xf32>
    %27 = vector.broadcast %26 : vector<1x1xf32> to vector<2x16xf32>
    %28 = arith.addf %25, %27 : vector<2x16xf32>
    %cst_17 = arith.constant dense<0xFF800000> : vector<2xf32>
    %29 = vector.multi_reduction <maximumf>, %28, %cst_17 [1] : vector<2x16xf32> to vector<2xf32>
    %30 = vector.shape_cast %29 : vector<2xf32> to vector<2x1xf32>
    %31 = vector.broadcast %30 : vector<2x1xf32> to vector<2x16xf32>
    %32 = arith.subf %28, %31 : vector<2x16xf32>
    %33 = math.exp %32 : vector<2x16xf32>
    %cst_18 = arith.constant dense<0.000000e+00> : vector<2xf32>
    %34 = vector.multi_reduction <add>, %33, %cst_18 [1] : vector<2x16xf32> to vector<2xf32>
    %35 = vector.shape_cast %34 : vector<2xf32> to vector<2x1xf32>
    %36 = tpu.reciprocal %35 : vector<2x1xf32> -> vector<2x1xf32>
    %37 = vector.broadcast %36 : vector<2x1xf32> to vector<2x16xf32>
    %38 = arith.mulf %33, %37 : vector<2x16xf32>
    %c0_19 = arith.constant 0 : index
    %c0_20 = arith.constant 0 : index
    %c0_21 = arith.constant 0 : index
    %39 = vector.load %arg2[%c0_19, %c0_20, %c0_21] : memref<2x16x32xbf16, #tpu.memory_space<vmem>>, vector<2x16x32xbf16>
    %40 = arith.extf %39 : vector<2x16x32xbf16> to vector<2x16x32xf32>
    %41 = vector.shape_cast %38 : vector<2x16xf32> to vector<2x16x1xf32>
    %42 = vector.broadcast %41 : vector<2x16x1xf32> to vector<2x16x32xf32>
    %43 = arith.mulf %40, %42 : vector<2x16x32xf32>
    %cst_22 = arith.constant dense<0.000000e+00> : vector<2x32xf32>
    %44 = vector.multi_reduction <add>, %43, %cst_22 [1] : vector<2x16x32xf32> to vector<2x32xf32>
    %45 = arith.negf %12 : vector<2x32xf32>
    %46 = math.exp %45 : vector<2x32xf32>
    %cst_23 = arith.constant 1.000000e+00 : f32
    %47 = vector.broadcast %cst_23 : f32 to vector<2x32xf32>
    %48 = arith.addf %47, %46 : vector<2x32xf32>
    %49 = arith.divf %47, %48 : vector<2x32xf32>
    %50 = arith.mulf %49, %44 : vector<2x32xf32>
    %c0_24 = arith.constant 0 : index
    %c0_25 = arith.constant 0 : index
    %c0_26 = arith.constant 0 : index
    %51 = vector.load %arg6[%c0_24, %c0_25, %c0_26] : memref<1x2x128xf32, #tpu.memory_space<vmem>>, vector<1x2x128xf32>
    %52 = vector.shape_cast %51 : vector<1x2x128xf32> to vector<2x128xf32>
    %53 = arith.addf %52, %13 : vector<2x128xf32>
    %54 = arith.truncf %50 : vector<2x32xf32> to vector<2x32xbf16>
    %c0_27 = arith.constant 0 : index
    %c0_28 = arith.constant 0 : index
    %55 = vector.load %arg9[%c0_27, %c0_28] : memref<32x128xbf16, #tpu.memory_space<vmem>>, vector<32x128xbf16>
    %cst_29 = arith.constant dense<0.000000e+00> : vector<2x128xf32>
    %56 = tpu.matmul %54, %55, %cst_29 {dimension_numbers = #tpu.dot_dimension_numbers<[1], [0], [0], [1], [0, 0, 1, 1], [], []>} : vector<2x32xbf16>, vector<32x128xbf16>, vector<2x128xf32> -> vector<2x128xf32>
    %57 = arith.addf %53, %56 : vector<2x128xf32>
    %58 = vector.extract_strided_slice %57 {offsets = [0, 0], sizes = [2, 32], strides = [1, 1]} : vector<2x128xf32> to vector<2x32xf32>
    %59 = arith.negf %58 : vector<2x32xf32>
    %60 = math.exp %59 : vector<2x32xf32>
    %cst_30 = arith.constant 1.000000e+00 : f32
    %61 = vector.broadcast %cst_30 : f32 to vector<2x32xf32>
    %62 = arith.addf %61, %60 : vector<2x32xf32>
    %63 = arith.divf %61, %62 : vector<2x32xf32>
    %64 = vector.extract_strided_slice %57 {offsets = [0, 32], sizes = [2, 32], strides = [1, 1]} : vector<2x128xf32> to vector<2x32xf32>
    %65 = arith.negf %64 : vector<2x32xf32>
    %66 = math.exp %65 : vector<2x32xf32>
    %cst_31 = arith.constant 1.000000e+00 : f32
    %67 = vector.broadcast %cst_31 : f32 to vector<2x32xf32>
    %68 = arith.addf %67, %66 : vector<2x32xf32>
    %69 = arith.divf %67, %68 : vector<2x32xf32>
    %70 = vector.extract_strided_slice %57 {offsets = [0, 64], sizes = [2, 32], strides = [1, 1]} : vector<2x128xf32> to vector<2x32xf32>
    %71 = math.tanh %70 : vector<2x32xf32>
    %72 = vector.extract_strided_slice %57 {offsets = [0, 96], sizes = [2, 32], strides = [1, 1]} : vector<2x128xf32> to vector<2x32xf32>
    %73 = arith.negf %72 : vector<2x32xf32>
    %74 = math.exp %73 : vector<2x32xf32>
    %cst_32 = arith.constant 1.000000e+00 : f32
    %75 = vector.broadcast %cst_32 : f32 to vector<2x32xf32>
    %76 = arith.addf %75, %74 : vector<2x32xf32>
    %77 = arith.divf %75, %76 : vector<2x32xf32>
    %78 = arith.mulf %69, %4 : vector<2x32xf32>
    %79 = arith.mulf %63, %71 : vector<2x32xf32>
    %80 = arith.addf %78, %79 : vector<2x32xf32>
    %81 = math.tanh %80 : vector<2x32xf32>
    %82 = arith.mulf %77, %81 : vector<2x32xf32>
    %c0_33 = arith.constant 0 : index
    %c0_34 = arith.constant 0 : index
    %83 = vector.load %arg14[%c0_33, %c0_34] : memref<2x32xf32, #tpu.memory_space<vmem>>, vector<2x32xf32>
    tpu.vector_store %arg14[%c0_33, %c0_34], %82 {strides = array<i32>} : memref<2x32xf32, #tpu.memory_space<vmem>>, vector<2x32xf32>,
    %c0_35 = arith.constant 0 : index
    %c0_36 = arith.constant 0 : index
    %84 = vector.load %arg15[%c0_35, %c0_36] : memref<2x32xf32, #tpu.memory_space<vmem>>, vector<2x32xf32>
    tpu.vector_store %arg15[%c0_35, %c0_36], %80 {strides = array<i32>} : memref<2x32xf32, #tpu.memory_space<vmem>>, vector<2x32xf32>,
    %85 = arith.truncf %82 : vector<2x32xf32> to vector<2x32xbf16>
    %c0_37 = arith.constant 0 : index
    %c0_38 = arith.constant 0 : index
    %c0_39 = arith.constant 0 : index
    %86 = vector.load %arg12[%c0_37, %c0_38, %c0_39] : memref<1x2x32xbf16, #tpu.memory_space<vmem>>, vector<1x2x32xbf16>
    %87 = vector.shape_cast %86 : vector<1x2x32xbf16> to vector<2x32xbf16>
    %88 = vector.shape_cast %85 : vector<2x32xbf16> to vector<1x2x32xbf16>
    tpu.vector_store %arg12[%c0_37, %c0_38, %c0_39], %88 {strides = array<i32>} : memref<1x2x32xbf16, #tpu.memory_space<vmem>>, vector<1x2x32xbf16>,
    %c0_40 = arith.constant 0 : index
    %c0_41 = arith.constant 0 : index
    %c0_42 = arith.constant 0 : index
    %89 = vector.load %arg13[%c0_40, %c0_41, %c0_42] : memref<1x2x16xf32, #tpu.memory_space<vmem>>, vector<1x2x16xf32>
    %90 = vector.shape_cast %89 : vector<1x2x16xf32> to vector<2x16xf32>
    %91 = vector.shape_cast %38 : vector<2x16xf32> to vector<1x2x16xf32>
    tpu.vector_store %arg13[%c0_40, %c0_41, %c0_42], %91 {strides = array<i32>} : memref<1x2x16xf32, #tpu.memory_space<vmem>>, vector<1x2x16xf32>,
    return
  }
  func.func @transform_0(%arg0: i32, %arg1: i32) -> (i32, i32, i32) {
    %c0_i32 = arith.constant 0 : i32
    %c0_i32_0 = arith.constant 0 : i32
    %c0_i32_1 = arith.constant 0 : i32
    return %arg0, %c0_i32, %c0_i32_0 : i32, i32, i32
  }
  func.func @transform_1(%arg0: i32, %arg1: i32) -> (i32, i32, i32) {
    %c0_i32 = arith.constant 0 : i32
    %c0_i32_0 = arith.constant 0 : i32
    %c0_i32_1 = arith.constant 0 : i32
    return %arg0, %c0_i32, %c0_i32_0 : i32, i32, i32
  }
  func.func @transform_2(%arg0: i32, %arg1: i32) -> (i32, i32) {
    %c0_i32 = arith.constant 0 : i32
    %c0_i32_0 = arith.constant 0 : i32
    return %arg0, %c0_i32 : i32, i32
  }
  func.func @transform_3(%arg0: i32, %arg1: i32) -> (i32, i32) {
    %c0_i32 = arith.constant 0 : i32
    %c0_i32_0 = arith.constant 0 : i32
    return %arg0, %c0_i32 : i32, i32
  }
  func.func @transform_4(%arg0: i32, %arg1: i32) -> (i32, i32, i32) {
    %c0_i32 = arith.constant 0 : i32
    %c0_i32_0 = arith.constant 0 : i32
    return %arg1, %arg0, %c0_i32 : i32, i32, i32
  }
  func.func @transform_5(%arg0: i32, %arg1: i32) -> (i32, i32) {
    %c0_i32 = arith.constant 0 : i32
    %c0_i32_0 = arith.constant 0 : i32
    %c0_i32_1 = arith.constant 0 : i32
    return %c0_i32, %c0_i32_0 : i32, i32
  }
  func.func @transform_6(%arg0: i32, %arg1: i32) -> (i32, i32) {
    %c0_i32 = arith.constant 0 : i32
    %c0_i32_0 = arith.constant 0 : i32
    %c0_i32_1 = arith.constant 0 : i32
    return %c0_i32, %c0_i32_0 : i32, i32
  }
  func.func @transform_7(%arg0: i32, %arg1: i32) -> (i32, i32) {
    %c0_i32 = arith.constant 0 : i32
    %c0_i32_0 = arith.constant 0 : i32
    %c0_i32_1 = arith.constant 0 : i32
    return %c0_i32, %c0_i32_0 : i32, i32
  }
  func.func @transform_8(%arg0: i32, %arg1: i32) -> (i32, i32) {
    %c0_i32 = arith.constant 0 : i32
    %c0_i32_0 = arith.constant 0 : i32
    %c0_i32_1 = arith.constant 0 : i32
    return %c0_i32, %c0_i32_0 : i32, i32
  }
  func.func @transform_9(%arg0: i32, %arg1: i32) -> (i32, i32) {
    %c0_i32 = arith.constant 0 : i32
    %c0_i32_0 = arith.constant 0 : i32
    %c0_i32_1 = arith.constant 0 : i32
    return %c0_i32, %c0_i32_0 : i32, i32
  }
  func.func @transform_10(%arg0: i32, %arg1: i32) -> (i32, i32, i32) {
    %c0_i32 = arith.constant 0 : i32
    %c0_i32_0 = arith.constant 0 : i32
    return %arg1, %arg0, %c0_i32 : i32, i32, i32
  }
  func.func @transform_11(%arg0: i32, %arg1: i32) -> (i32, i32, i32) {
    %c0_i32 = arith.constant 0 : i32
    %c0_i32_0 = arith.constant 0 : i32
    return %arg1, %arg0, %c0_i32 : i32, i32, i32
  }
}

module attributes {stable_mosaic.version = 11 : i64} {
  func.func @decoder_step_kernel(%arg0: i32, %arg1: i32, %arg2: memref<2x16x32xbf16, #tpu.memory_space<vmem>>, %arg3: memref<2x16x32xbf16, #tpu.memory_space<vmem>>, %arg4: memref<2x32xf32, #tpu.memory_space<vmem>>, %arg5: memref<2x32xf32, #tpu.memory_space<vmem>>, %arg6: memref<1x2x128xf32, #tpu.memory_space<vmem>>, %arg7: memref<32x192xbf16, #tpu.memory_space<vmem>>, %arg8: memref<1x192xf32, #tpu.memory_space<vmem>>, %arg9: memref<32x128xbf16, #tpu.memory_space<vmem>>, %arg10: memref<1x32xf32, #tpu.memory_space<vmem>>, %arg11: memref<1x1xf32, #tpu.memory_space<vmem>>, %arg12: memref<1x2x32xbf16, #tpu.memory_space<vmem>>, %arg13: memref<1x2x16xf32, #tpu.memory_space<vmem>>, %arg14: memref<2x32xf32, #tpu.memory_space<vmem>>, %arg15: memref<2x32xf32, #tpu.memory_space<vmem>>) attributes {dimension_semantics = [#tpu.dimension_semantics<parallel>, #tpu.dimension_semantics<arbitrary>], iteration_bounds = array<i64: 1, 8>, scalar_prefetch = 0 : i64, scratch_operands = 2 : i64, tpu.core_type = #tpu.core_type<tc>, window_params = [{transform_indices = @transform_0, window_bounds = array<i64: 2, 16, 32>}, {transform_indices = @transform_1, window_bounds = array<i64: 2, 16, 32>}, {transform_indices = @transform_2, window_bounds = array<i64: 2, 32>}, {transform_indices = @transform_3, window_bounds = array<i64: 2, 32>}, {transform_indices = @transform_4, window_bounds = array<i64: 1, 2, 128>}, {pipeline_mode = #tpu.pipeline_mode<synchronous>, transform_indices = @transform_5, window_bounds = array<i64: 32, 192>}, {pipeline_mode = #tpu.pipeline_mode<synchronous>, transform_indices = @transform_6, window_bounds = array<i64: 1, 192>}, {pipeline_mode = #tpu.pipeline_mode<synchronous>, transform_indices = @transform_7, window_bounds = array<i64: 32, 128>}, {pipeline_mode = #tpu.pipeline_mode<synchronous>, transform_indices = @transform_8, window_bounds = array<i64: 1, 32>}, {pipeline_mode = #tpu.pipeline_mode<synchronous>, transform_indices = @transform_9, window_bounds = array<i64: 1, 1>}, {transform_indices = @transform_10, window_bounds = array<i64: 1, 2, 32>}, {transform_indices = @transform_11, window_bounds = array<i64: 1, 2, 16>}]} {
    %c0_i32 = arith.constant 0 : i32
    %0 = arith.cmpi eq, %arg1, %c0_i32 : i32
    %1 = arith.extui %0 : i1 to i32
    %c0_i32_0 = arith.constant 0 : i32
    %2 = arith.cmpi ne, %1, %c0_i32_0 : i32
    scf.if %2 {
      %c0_43 = arith.constant 0 : index
      %c0_44 = arith.constant 0 : index
      %92 = vector.load %arg4[%c0_43, %c0_44] : memref<2x32xf32, #tpu.memory_space<vmem>>, vector<2x32xf32>
      %c0_45 = arith.constant 0 : index
      %c0_46 = arith.constant 0 : index
      %93 = vector.load %arg14[%c0_45, %c0_46] : memref<2x32xf32, #tpu.memory_space<vmem>>, vector<2x32xf32>
      tpu.vector_store %arg14[%c0_45, %c0_46], %92 {strides = array<i32>} : memref<2x32xf32, #tpu.memory_space<vmem>>, vector<2x32xf32>,
      %c0_47 = arith.constant 0 : index
      %c0_48 = arith.constant 0 : index
      %94 = vector.load %arg5[%c0_47, %c0_48] : memref<2x32xf32, #tpu.memory_space<vmem>>, vector<2x32xf32>
      %c0_49 = arith.constant 0 : index
      %c0_50 = arith.constant 0 : index
      %95 = vector.load %arg15[%c0_49, %c0_50] : memref<2x32xf32, #tpu.memory_space<vmem>>, vector<2x32xf32>
      tpu.vector_store %arg15[%c0_49, %c0_50], %94 {strides = array<i32>} : memref<2x32xf32, #tpu.memory_space<vmem>>, vector<2x32xf32>,
    } else {
    }
    %c0 = arith.constant 0 : index
    %c0_1 = arith.constant 0 : index
    %3 = vector.load %arg14[%c0, %c0_1] : memref<2x32xf32, #tpu.memory_space<vmem>>, vector<2x32xf32>
    %c0_2 = arith.constant 0 : index
    %c0_3 = arith.constant 0 : index
    %4 = vector.load %arg15[%c0_2, %c0_3] : memref<2x32xf32, #tpu.memory_space<vmem>>, vector<2x32xf32>
    %5 = arith.truncf %3 : vector<2x32xf32> to vector<2x32xbf16>
    %c0_4 = arith.constant 0 : index
    %c0_5 = arith.constant 0 : index
    %6 = vector.load %arg7[%c0_4, %c0_5] : memref<32x192xbf16, #tpu.memory_space<vmem>>, vector<32x192xbf16>
    %cst = arith.constant dense<0.000000e+00> : vector<2x192xf32>
    %7 = tpu.matmul %5, %6, %cst {dimension_numbers = #tpu.dot_dimension_numbers<[1], [0], [0], [1], [0, 0, 1, 1], [], []>} : vector<2x32xbf16>, vector<32x192xbf16>, vector<2x192xf32> -> vector<2x192xf32>
    %c0_6 = arith.constant 0 : index
    %c0_7 = arith.constant 0 : index
    %8 = vector.load %arg8[%c0_6, %c0_7] : memref<1x192xf32, #tpu.memory_space<vmem>>, vector<1x192xf32>
    %9 = vector.broadcast %8 : vector<1x192xf32> to vector<2x192xf32>
    %10 = arith.addf %7, %9 : vector<2x192xf32>
    %11 = vector.extract_strided_slice %10 {offsets = [0, 0], sizes = [2, 32], strides = [1, 1]} : vector<2x192xf32> to vector<2x32xf32>
    %12 = vector.extract_strided_slice %10 {offsets = [0, 32], sizes = [2, 32], strides = [1, 1]} : vector<2x192xf32> to vector<2x32xf32>
    %13 = vector.extract_strided_slice %10 {offsets = [0, 64], sizes = [2, 128], strides = [1, 1]} : vector<2x192xf32> to vector<2x128xf32>
    %c0_8 = arith.constant 0 : index
    %c0_9 = arith.constant 0 : index
    %c0_10 = arith.constant 0 : index
    %14 = vector.load %arg3[%c0_8, %c0_9, %c0_10] : memref<2x16x32xbf16, #tpu.memory_space<vmem>>, vector<2x16x32xbf16>
    %15 = arith.extf %14 : vector<2x16x32xbf16> to vector<2x16x32xf32>
    %16 = vector.shape_cast %11 : vector<2x32xf32> to vector<2x1x32xf32>
    %17 = vector.broadcast %16 : vector<2x1x32xf32> to vector<2x16x32xf32>
    %18 = arith.addf %15, %17 : vector<2x16x32xf32>
    %cst_11 = arith.constant 0.000000e+00 : f32
    %19 = vector.broadcast %cst_11 : f32 to vector<2x16x32xf32>
    %20 = arith.maximumf %18, %19 : vector<2x16x32xf32>
    %c0_12 = arith.constant 0 : index
    %c0_13 = arith.constant 0 : index
    %21 = vector.load %arg10[%c0_12, %c0_13] : memref<1x32xf32, #tpu.memory_space<vmem>>, vector<1x32xf32>
    %22 = vector.shape_cast %21 : vector<1x32xf32> to vector<1x1x32xf32>
    %23 = vector.broadcast %22 : vector<1x1x32xf32> to vector<2x16x32xf32>
    %24 = arith.mulf %20, %23 : vector<2x16x32xf32>
    %cst_14 = arith.constant dense<0.000000e+00> : vector<2x16xf32>
    %25 = vector.multi_reduction <add>, %24, %cst_14 [2] : vector<2x16x32xf32> to vector<2x16xf32>
    %c0_15 = arith.constant 0 : index
    %c0_16 = arith.constant 0 : index
    %26 = vector.load %arg11[%c0_15, %c0_16] : memref<1x1xf32, #tpu.memory_space<vmem>>, vector<1x1xf32>
    %27 = vector.broadcast %26 : vector<1x1xf32> to vector<2x16xf32>
    %28 = arith.addf %25, %27 : vector<2x16xf32>
    %cst_17 = arith.constant dense<0xFF800000> : vector<2xf32>
    %29 = vector.multi_reduction <maximumf>, %28, %cst_17 [1] : vector<2x16xf32> to vector<2xf32>
    %30 = vector.shape_cast %29 : vector<2xf32> to vector<2x1xf32>
    %31 = vector.broadcast %30 : vector<2x1xf32> to vector<2x16xf32>
    %32 = arith.subf %28, %31 : vector<2x16xf32>
    %33 = math.exp %32 : vector<2x16xf32>
    %cst_18 = arith.constant dense<0.000000e+00> : vector<2xf32>
    %34 = vector.multi_reduction <add>, %33, %cst_18 [1] : vector<2x16xf32> to vector<2xf32>
    %35 = vector.shape_cast %34 : vector<2xf32> to vector<2x1xf32>
    %36 = tpu.reciprocal %35 : vector<2x1xf32> -> vector<2x1xf32>
    %37 = vector.broadcast %36 : vector<2x1xf32> to vector<2x16xf32>
    %38 = arith.mulf %33, %37 : vector<2x16xf32>
    %c0_19 = arith.constant 0 : index
    %c0_20 = arith.constant 0 : index
    %c0_21 = arith.constant 0 : index
    %39 = vector.load %arg2[%c0_19, %c0_20, %c0_21] : memref<2x16x32xbf16, #tpu.memory_space<vmem>>, vector<2x16x32xbf16>
    %40 = arith.extf %39 : vector<2x16x32xbf16> to vector<2x16x32xf32>
    %41 = vector.shape_cast %38 : vector<2x16xf32> to vector<2x16x1xf32>
    %42 = vector.broadcast %41 : vector<2x16x1xf32> to vector<2x16x32xf32>
    %43 = arith.mulf %40, %42 : vector<2x16x32xf32>
    %cst_22 = arith.constant dense<0.000000e+00> : vector<2x32xf32>
    %44 = vector.multi_reduction <add>, %43, %cst_22 [1] : vector<2x16x32xf32> to vector<2x32xf32>
    %45 = arith.negf %12 : vector<2x32xf32>
    %46 = math.exp %45 : vector<2x32xf32>
    %cst_23 = arith.constant 1.000000e+00 : f32
    %47 = vector.broadcast %cst_23 : f32 to vector<2x32xf32>
    %48 = arith.addf %47, %46 : vector<2x32xf32>
    %49 = arith.divf %47, %48 : vector<2x32xf32>
    %50 = arith.mulf %49, %44 : vector<2x32xf32>
    %c0_24 = arith.constant 0 : index
    %c0_25 = arith.constant 0 : index
    %c0_26 = arith.constant 0 : index
    %51 = vector.load %arg6[%c0_24, %c0_25, %c0_26] : memref<1x2x128xf32, #tpu.memory_space<vmem>>, vector<1x2x128xf32>
    %52 = vector.shape_cast %51 : vector<1x2x128xf32> to vector<2x128xf32>
    %53 = arith.addf %52, %13 : vector<2x128xf32>
    %54 = arith.truncf %50 : vector<2x32xf32> to vector<2x32xbf16>
    %c0_27 = arith.constant 0 : index
    %c0_28 = arith.constant 0 : index
    %55 = vector.load %arg9[%c0_27, %c0_28] : memref<32x128xbf16, #tpu.memory_space<vmem>>, vector<32x128xbf16>
    %cst_29 = arith.constant dense<0.000000e+00> : vector<2x128xf32>
    %56 = tpu.matmul %54, %55, %cst_29 {dimension_numbers = #tpu.dot_dimension_numbers<[1], [0], [0], [1], [0, 0, 1, 1], [], []>} : vector<2x32xbf16>, vector<32x128xbf16>, vector<2x128xf32> -> vector<2x128xf32>
    %57 = arith.addf %53, %56 : vector<2x128xf32>
    %58 = vector.extract_strided_slice %57 {offsets = [0, 0], sizes = [2, 32], strides = [1, 1]} : vector<2x128xf32> to vector<2x32xf32>
    %59 = arith.negf %58 : vector<2x32xf32>
    %60 = math.exp %59 : vector<2x32xf32>
    %cst_30 = arith.constant 1.000000e+00 : f32
    %61 = vector.broadcast %cst_30 : f32 to vector<2x32xf32>
    %62 = arith.addf %61, %60 : vector<2x32xf32>
    %63 = arith.divf %61, %62 : vector<2x32xf32>
    %64 = vector.extract_strided_slice %57 {offsets = [0, 32], sizes = [2, 32], strides = [1, 1]} : vector<2x128xf32> to vector<2x32xf32>
    %65 = arith.negf %64 : vector<2x32xf32>
    %66 = math.exp %65 : vector<2x32xf32>
    %cst_31 = arith.constant 1.000000e+00 : f32
    %67 = vector.broadcast %cst_31 : f32 to vector<2x32xf32>
    %68 = arith.addf %67, %66 : vector<2x32xf32>
    %69 = arith.divf %67, %68 : vector<2x32xf32>
    %70 = vector.extract_strided_slice %57 {offsets = [0, 64], sizes = [2, 32], strides = [1, 1]} : vector<2x128xf32> to vector<2x32xf32>
    %71 = math.tanh %70 : vector<2x32xf32>
    %72 = vector.extract_strided_slice %57 {offsets = [0, 96], sizes = [2, 32], strides = [1, 1]} : vector<2x128xf32> to vector<2x32xf32>
    %73 = arith.negf %72 : vector<2x32xf32>
    %74 = math.exp %73 : vector<2x32xf32>
    %cst_32 = arith.constant 1.000000e+00 : f32
    %75 = vector.broadcast %cst_32 : f32 to vector<2x32xf32>
    %76 = arith.addf %75, %74 : vector<2x32xf32>
    %77 = arith.divf %75, %76 : vector<2x32xf32>
    %78 = arith.mulf %69, %4 : vector<2x32xf32>
    %79 = arith.mulf %63, %71 : vector<2x32xf32>
    %80 = arith.addf %78, %79 : vector<2x32xf32>
    %81 = math.tanh %80 : vector<2x32xf32>
    %82 = arith.mulf %77, %81 : vector<2x32xf32>
    %c0_33 = arith.constant 0 : index
    %c0_34 = arith.constant 0 : index
    %83 = vector.load %arg14[%c0_33, %c0_34] : memref<2x32xf32, #tpu.memory_space<vmem>>, vector<2x32xf32>
    tpu.vector_store %arg14[%c0_33, %c0_34], %82 {strides = array<i32>} : memref<2x32xf32, #tpu.memory_space<vmem>>, vector<2x32xf32>,
    %c0_35 = arith.constant 0 : index
    %c0_36 = arith.constant 0 : index
    %84 = vector.load %arg15[%c0_35, %c0_36] : memref<2x32xf32, #tpu.memory_space<vmem>>, vector<2x32xf32>
    tpu.vector_store %arg15[%c0_35, %c0_36], %80 {strides = array<i32>} : memref<2x32xf32, #tpu.memory_space<vmem>>, vector<2x32xf32>,
    %85 = arith.truncf %82 : vector<2x32xf32> to vector<2x32xbf16>
    %c0_37 = arith.constant 0 : index
    %c0_38 = arith.constant 0 : index
    %c0_39 = arith.constant 0 : index
    %86 = vector.load %arg12[%c0_37, %c0_38, %c0_39] : memref<1x2x32xbf16, #tpu.memory_space<vmem>>, vector<1x2x32xbf16>
    %87 = vector.shape_cast %86 : vector<1x2x32xbf16> to vector<2x32xbf16>
    %88 = vector.shape_cast %85 : vector<2x32xbf16> to vector<1x2x32xbf16>
    tpu.vector_store %arg12[%c0_37, %c0_38, %c0_39], %88 {strides = array<i32>} : memref<1x2x32xbf16, #tpu.memory_space<vmem>>, vector<1x2x32xbf16>,
    %c0_40 = arith.constant 0 : index
    %c0_41 = arith.constant 0 : index
    %c0_42 = arith.constant 0 : index
    %89 = vector.load %arg13[%c0_40, %c0_41, %c0_42] : memref<1x2x16xf32, #tpu.memory_space<vmem>>, vector<1x2x16xf32>
    %90 = vector.shape_cast %89 : vector<1x2x16xf32> to vector<2x16xf32>
    %91 = vector.shape_cast %38 : vector<2x16xf32> to vector<1x2x16xf32>
    tpu.vector_store %arg13[%c0_40, %c0_41, %c0_42], %91 {strides = array<i32>} : memref<1x2x16xf32, #tpu.memory_space<vmem>>, vector<1x2x16xf32>,
    return
  }
  func.func @transform_0(%arg0: i32, %arg1: i32) -> (i32, i32, i32) {
    %c0_i32 = arith.constant 0 : i32
    %c0_i32_0 = arith.constant 0 : i32
    %c0_i32_1 = arith.constant 0 : i32
    return %arg0, %c0_i32, %c0_i32_0 : i32, i32, i32
  }
  func.func @transform_1(%arg0: i32, %arg1: i32) -> (i32, i32, i32) {
    %c0_i32 = arith.constant 0 : i32
    %c0_i32_0 = arith.constant 0 : i32
    %c0_i32_1 = arith.constant 0 : i32
    return %arg0, %c0_i32, %c0_i32_0 : i32, i32, i32
  }
  func.func @transform_2(%arg0: i32, %arg1: i32) -> (i32, i32) {
    %c0_i32 = arith.constant 0 : i32
    %c0_i32_0 = arith.constant 0 : i32
    return %arg0, %c0_i32 : i32, i32
  }
  func.func @transform_3(%arg0: i32, %arg1: i32) -> (i32, i32) {
    %c0_i32 = arith.constant 0 : i32
    %c0_i32_0 = arith.constant 0 : i32
    return %arg0, %c0_i32 : i32, i32
  }
  func.func @transform_4(%arg0: i32, %arg1: i32) -> (i32, i32, i32) {
    %c0_i32 = arith.constant 0 : i32
    %c0_i32_0 = arith.constant 0 : i32
    return %arg1, %arg0, %c0_i32 : i32, i32, i32
  }
  func.func @transform_5(%arg0: i32, %arg1: i32) -> (i32, i32) {
    %c0_i32 = arith.constant 0 : i32
    %c0_i32_0 = arith.constant 0 : i32
    %c0_i32_1 = arith.constant 0 : i32
    return %c0_i32, %c0_i32_0 : i32, i32
  }
  func.func @transform_6(%arg0: i32, %arg1: i32) -> (i32, i32) {
    %c0_i32 = arith.constant 0 : i32
    %c0_i32_0 = arith.constant 0 : i32
    %c0_i32_1 = arith.constant 0 : i32
    return %c0_i32, %c0_i32_0 : i32, i32
  }
  func.func @transform_7(%arg0: i32, %arg1: i32) -> (i32, i32) {
    %c0_i32 = arith.constant 0 : i32
    %c0_i32_0 = arith.constant 0 : i32
    %c0_i32_1 = arith.constant 0 : i32
    return %c0_i32, %c0_i32_0 : i32, i32
  }
  func.func @transform_8(%arg0: i32, %arg1: i32) -> (i32, i32) {
    %c0_i32 = arith.constant 0 : i32
    %c0_i32_0 = arith.constant 0 : i32
    %c0_i32_1 = arith.constant 0 : i32
    return %c0_i32, %c0_i32_0 : i32, i32
  }
  func.func @transform_9(%arg0: i32, %arg1: i32) -> (i32, i32) {
    %c0_i32 = arith.constant 0 : i32
    %c0_i32_0 = arith.constant 0 : i32
    %c0_i32_1 = arith.constant 0 : i32
    return %c0_i32, %c0_i32_0 : i32, i32
  }
  func.func @transform_10(%arg0: i32, %arg1: i32) -> (i32, i32, i32) {
    %c0_i32 = arith.constant 0 : i32
    %c0_i32_0 = arith.constant 0 : i32
    return %arg1, %arg0, %c0_i32 : i32, i32, i32
  }
  func.func @transform_11(%arg0: i32, %arg1: i32) -> (i32, i32, i32) {
    %c0_i32 = arith.constant 0 : i32
    %c0_i32_0 = arith.constant 0 : i32
    return %arg1, %arg0, %c0_i32 : i32, i32, i32
  }
}

module attributes {stable_mosaic.version = 11 : i64} {
  func.func @fc_head_kernel(%arg0: i32, %arg1: i32, %arg2: memref<128x32xbf16, #tpu.memory_space<vmem>>, %arg3: memref<32x64xbf16, #tpu.memory_space<vmem>>, %arg4: memref<1x64xf32, #tpu.memory_space<vmem>>, %arg5: memref<128x64xf32, #tpu.memory_space<vmem>>) attributes {dimension_semantics = [#tpu.dimension_semantics<parallel>, #tpu.dimension_semantics<parallel>], iteration_bounds = array<i64: 1, 1>, scalar_prefetch = 0 : i64, scratch_operands = 0 : i64, tpu.core_type = #tpu.core_type<tc>, window_params = [{transform_indices = @transform_0, window_bounds = array<i64: 128, 32>}, {transform_indices = @transform_1, window_bounds = array<i64: 32, 64>}, {transform_indices = @transform_2, window_bounds = array<i64: 1, 64>}, {transform_indices = @transform_3, window_bounds = array<i64: 128, 64>}]} {
    %c0 = arith.constant 0 : index
    %c0_0 = arith.constant 0 : index
    %0 = vector.load %arg2[%c0, %c0_0] : memref<128x32xbf16, #tpu.memory_space<vmem>>, vector<128x32xbf16>
    %c0_1 = arith.constant 0 : index
    %c0_2 = arith.constant 0 : index
    %1 = vector.load %arg3[%c0_1, %c0_2] : memref<32x64xbf16, #tpu.memory_space<vmem>>, vector<32x64xbf16>
    %cst = arith.constant dense<0.000000e+00> : vector<128x64xf32>
    %2 = tpu.matmul %0, %1, %cst {dimension_numbers = #tpu.dot_dimension_numbers<[1], [0], [0], [1], [0, 0, 1, 1], [], []>} : vector<128x32xbf16>, vector<32x64xbf16>, vector<128x64xf32> -> vector<128x64xf32>
    %c0_3 = arith.constant 0 : index
    %c0_4 = arith.constant 0 : index
    %3 = vector.load %arg4[%c0_3, %c0_4] : memref<1x64xf32, #tpu.memory_space<vmem>>, vector<1x64xf32>
    %4 = vector.broadcast %3 : vector<1x64xf32> to vector<128x64xf32>
    %5 = arith.addf %2, %4 : vector<128x64xf32>
    %c0_5 = arith.constant 0 : index
    %c0_6 = arith.constant 0 : index
    %6 = vector.load %arg5[%c0_5, %c0_6] : memref<128x64xf32, #tpu.memory_space<vmem>>, vector<128x64xf32>
    tpu.vector_store %arg5[%c0_5, %c0_6], %5 {strides = array<i32>} : memref<128x64xf32, #tpu.memory_space<vmem>>, vector<128x64xf32>,
    return
  }
  func.func @transform_0(%arg0: i32, %arg1: i32) -> (i32, i32) {
    %c0_i32 = arith.constant 0 : i32
    %c0_i32_0 = arith.constant 0 : i32
    return %arg0, %c0_i32 : i32, i32
  }
  func.func @transform_1(%arg0: i32, %arg1: i32) -> (i32, i32) {
    %c0_i32 = arith.constant 0 : i32
    %c0_i32_0 = arith.constant 0 : i32
    return %c0_i32, %arg1 : i32, i32
  }
  func.func @transform_2(%arg0: i32, %arg1: i32) -> (i32, i32) {
    %c0_i32 = arith.constant 0 : i32
    %c0_i32_0 = arith.constant 0 : i32
    return %c0_i32, %arg1 : i32, i32
  }
  func.func @transform_3(%arg0: i32, %arg1: i32) -> (i32, i32) {
    %c0_i32 = arith.constant 0 : i32
    return %arg0, %arg1 : i32, i32
  }
}

</mosaic_0001>

<llo_original>
// kernel: decoder_forward.3
$region0: #{decoder_forward.3}
  #allocation0 [shape = 'u32[]', space=smem, size = 0x4, offset = 0x4, fixed_abs, tag = 'smem constant byte address 0x4 - core index']
  #allocation1 [shape = 'u32[72,128]{1,0:T(1,128)}', space=vmem, size = 0x9000, scoped, tag = 'internal scratch']
  %s0 = inlined_call_operand.vmem [shape: bf16[128,32], index: 0, kind: input, shape index: {}]
  %s1 = inlined_call_operand.vmem [shape: bf16[32,64], index: 1, kind: input, shape index: {}]
  %s2 = inlined_call_operand.vmem [shape: f32[1,64], index: 2, kind: input, shape index: {}]
  %s3 = inlined_call_operand.vmem [shape: f32[128,64], index: 3, kind: output, shape index: {}]
  %s4 = sld [smem:[#allocation0]]
  $region22: #{decoder_forward.3} parent=0
    _
  %s6 = ssub.s32 1, %s4
  %s7 = scalar_select 0, %s6, %s4
  // Predicated region
  $region2: #{decoder_forward.3} parent=0 // pred_check
    _
  $region3: #{decoder_forward.3} parent=0 // pred_check_branch
    %9 = sbr.rel (0) target = $region5
  $region4: #{decoder_forward.3} parent=0 // pred_region
    _
  $region5: #{decoder_forward.3} parent=0 // pred_fallthru
    _
  // Predicated region
  $region6: #{decoder_forward.3} parent=0 // pred_check
    _
  $region7: #{decoder_forward.3} parent=0 // pred_check_branch
    %11 = sbr.rel (0) target = $region9
  $region8: #{decoder_forward.3} parent=0 // pred_region
    _
  $region9: #{decoder_forward.3} parent=0 // pred_fallthru
    _
  // Predicated region
  $region10: #{decoder_forward.3} parent=0 // pred_check
    _
  $region11: #{decoder_forward.3} parent=0 // pred_check_branch
    %13 = sbr.rel (0) target = $region13
  $region12: #{decoder_forward.3} parent=0 // pred_region
    _
  $region13: #{decoder_forward.3} parent=0 // pred_fallthru
    _
  %v15 = vld [vmem:[%s0] sm:$0xf]
  %v16 = vld [vmem:[%s0 + $0x4] sm:$0xf]
  %v17 = vld [vmem:[%s0 + $0x8] sm:$0xf]
  %v18 = vld [vmem:[%s0 + $0xc] sm:$0xf]
  %v19 = vld [vmem:[%s0 + $0x10] sm:$0xf]
  %v20 = vld [vmem:[%s0 + $0x14] sm:$0xf]
  %v21 = vld [vmem:[%s0 + $0x18] sm:$0xf]
  %v22 = vld [vmem:[%s0 + $0x1c] sm:$0xf]
  %v23 = vld [vmem:[%s0 + $0x20] sm:$0xf]
  %v24 = vld [vmem:[%s0 + $0x24] sm:$0xf]
  %v25 = vld [vmem:[%s0 + $0x28] sm:$0xf]
  %v26 = vld [vmem:[%s0 + $0x2c] sm:$0xf]
  %v27 = vld [vmem:[%s0 + $0x30] sm:$0xf]
  %v28 = vld [vmem:[%s0 + $0x34] sm:$0xf]
  %v29 = vld [vmem:[%s0 + $0x38] sm:$0xf]
  %v30 = vld [vmem:[%s0 + $0x3c] sm:$0xf]
  %v31 = vld [vmem:[%s1] sm:$0xf]
  %v32 = vld [vmem:[%s1 + $0x4] sm:$0xf]
  %v33 = vld [vmem:[%s1 + $0x8] sm:$0xf]
  %v34 = vld [vmem:[%s1 + $0xc] sm:$0xf]
  %v35 = vld [vmem:[%s2] sm:$0x1]
  %v37 = vperm.slane %v35, 0
  %v55 = vunpack.c.l.b16 %v15
  %v56 = vunpack.c.l.b16 %v16
  %v57 = vunpack.c.l.b16 %v17
  %v58 = vunpack.c.l.b16 %v18
  %v59 = vunpack.c.l.b16 %v19
  %v60 = vunpack.c.l.b16 %v20
  %v61 = vunpack.c.l.b16 %v21
  %v62 = vunpack.c.l.b16 %v22
  %v63 = vunpack.c.l.b16 %v23
  %v64 = vunpack.c.l.b16 %v24
  %v65 = vunpack.c.l.b16 %v25
  %v66 = vunpack.c.l.b16 %v26
  %v67 = vunpack.c.l.b16 %v27
  %v68 = vunpack.c.l.b16 %v28
  %v69 = vunpack.c.l.b16 %v29
  %v70 = vunpack.c.l.b16 %v30
  %v71 = vpack.c.b16 %v56, %v55
  %v72 = vpack.c.b16 %v58, %v57
  %v73 = vpack.c.b16 %v60, %v59
  %v74 = vpack.c.b16 %v62, %v61
  %v75 = vpack.c.b16 %v64, %v63
  %v76 = vpack.c.b16 %v66, %v65
  %v77 = vpack.c.b16 %v68, %v67
  %v78 = vpack.c.b16 %v70, %v69
  %v83 = vunpack.c.l.b16 %v31
  %v84 = vunpack.c.l.b16 %v32
  %v85 = vunpack.c.l.b16 %v33
  %v86 = vunpack.c.l.b16 %v34
  %v87 = vpack.c.b16 %v84, %v83
  %v88 = vpack.c.b16 %v86, %v85
  %vm91 = vcmask 261120
  %v93 = vsel %vm91, %v71, 0
  %v96 = vsel %vm91, %v72, 0
  %v99 = vsel %vm91, %v73, 0
  %v102 = vsel %vm91, %v74, 0
  %v105 = vsel %vm91, %v75, 0
  %v108 = vsel %vm91, %v76, 0
  %v111 = vsel %vm91, %v77, 0
  %v114 = vsel %vm91, %v78, 0
  %116 = vmatpush.bf16.msra.mxu0 0
  %117 = vmatpush.bf16.msra.mxu0 0
  %118 = vmatpush.bf16.msra.mxu0 0
  %119 = vmatpush.bf16.msra.mxu0 0
  %120 = vmatpush.bf16.msra.mxu0 0
  %121 = vmatpush.bf16.msra.mxu0 0
  %122 = vmatpush.bf16.msra.mxu0 %v88
  %123 = vmatpush.bf16.msra.mxu0 %v87
  %124 = vmatmul.bf16.gmra.mxu0 %v93
  %v125 = vpop.f32.mrf.mxu0
  %v126 = vadd.f32 %v37, %v125
  %v127 = vpop.f32.mrf.mxu0
  %v128 = vadd.f32 %v37, %v127
  %129 = vmatmul.bf16.gmra.mxu0 %v96
  %v130 = vpop.f32.mrf.mxu0
  %v131 = vadd.f32 %v37, %v130
  %v132 = vpop.f32.mrf.mxu0
  %v133 = vadd.f32 %v37, %v132
  %134 = vmatmul.bf16.gmra.mxu0 %v99
  %v135 = vpop.f32.mrf.mxu0
  %v136 = vadd.f32 %v37, %v135
  %v137 = vpop.f32.mrf.mxu0
  %v138 = vadd.f32 %v37, %v137
  %139 = vmatmul.bf16.gmra.mxu0 %v102
  %v140 = vpop.f32.mrf.mxu0
  %v141 = vadd.f32 %v37, %v140
  %v142 = vpop.f32.mrf.mxu0
  %v143 = vadd.f32 %v37, %v142
  %144 = vmatmul.bf16.gmra.mxu0 %v105
  %v145 = vpop.f32.mrf.mxu0
  %v146 = vadd.f32 %v37, %v145
  %v147 = vpop.f32.mrf.mxu0
  %v148 = vadd.f32 %v37, %v147
  %149 = vmatmul.bf16.gmra.mxu0 %v108
  %v150 = vpop.f32.mrf.mxu0
  %v151 = vadd.f32 %v37, %v150
  %v152 = vpop.f32.mrf.mxu0
  %v153 = vadd.f32 %v37, %v152
  %154 = vmatmul.bf16.gmra.mxu0 %v111
  %v155 = vpop.f32.mrf.mxu0
  %v156 = vadd.f32 %v37, %v155
  %v157 = vpop.f32.mrf.mxu0
  %v158 = vadd.f32 %v37, %v157
  %159 = vmatmul.bf16.gmra.mxu0 %v114
  %v160 = vpop.f32.mrf.mxu0
  %v161 = vadd.f32 %v37, %v160
  %v162 = vpop.f32.mrf.mxu0
  %v163 = vadd.f32 %v37, %v162
  %164 = vdwg.mxu0
  %vm165 = vcmask 523264
  %166 = vst.msk [vmem:[%s3] sm:$0xff] %vm165, %v126
  %167 = vst.msk [vmem:[%s3 + $0x8] sm:$0xff] %vm165, %v128
  %168 = vst.msk [vmem:[%s3 + $0x10] sm:$0xff] %vm165, %v131
  %169 = vst.msk [vmem:[%s3 + $0x18] sm:$0xff] %vm165, %v133
  %170 = vst.msk [vmem:[%s3 + $0x20] sm:$0xff] %vm165, %v136
  %171 = vst.msk [vmem:[%s3 + $0x28] sm:$0xff] %vm165, %v138
  %172 = vst.msk [vmem:[%s3 + $0x30] sm:$0xff] %vm165, %v141
  %173 = vst.msk [vmem:[%s3 + $0x38] sm:$0xff] %vm165, %v143
  %174 = vst.msk [vmem:[%s3 + $0x40] sm:$0xff] %vm165, %v146
  %175 = vst.msk [vmem:[%s3 + $0x48] sm:$0xff] %vm165, %v148
  %176 = vst.msk [vmem:[%s3 + $0x50] sm:$0xff] %vm165, %v151
  %177 = vst.msk [vmem:[%s3 + $0x58] sm:$0xff] %vm165, %v153
  %178 = vst.msk [vmem:[%s3 + $0x60] sm:$0xff] %vm165, %v156
  %179 = vst.msk [vmem:[%s3 + $0x68] sm:$0xff] %vm165, %v158
  %180 = vst.msk [vmem:[%s3 + $0x70] sm:$0xff] %vm165, %v161
  %181 = vst.msk [vmem:[%s3 + $0x78] sm:$0xff] %vm165, %v163
  // Predicated region
  $region14: #{decoder_forward.3} parent=0 // pred_check
    _
  $region15: #{decoder_forward.3} parent=0 // pred_check_branch
    %183 = sbr.rel (0) target = $region17
  $region16: #{decoder_forward.3} parent=0 // pred_region
    _
  $region17: #{decoder_forward.3} parent=0 // pred_fallthru
    _
  // Predicated region
  $region18: #{decoder_forward.3} parent=0 // pred_check
    _
  $region19: #{decoder_forward.3} parent=0 // pred_check_branch
    %185 = sbr.rel (0) target = $region21
  $region20: #{decoder_forward.3} parent=0 // pred_region
    _
  $region21: #{decoder_forward.3} parent=0 // pred_fallthru
    _

// kernel: decoder_forward.2
$region0: #{decoder_forward.2}
  #allocation0 [shape = 'u32[]', space=smem, size = 0x4, offset = 0x4, fixed_abs, tag = 'smem constant byte address 0x4 - core index']
  #allocation1 [shape = 'u32[72,128]{1,0:T(1,128)}', space=vmem, size = 0x9000, scoped, tag = 'internal scratch']
  #allocation2 [shape = 'f32[2,32]{1,0:T(2,128)}', space=vmem, size = 0x400, scoped, tag = 'scratch operand']
  #allocation3 [shape = 'f32[2,32]{1,0:T(2,128)}', space=vmem, size = 0x400, scoped, tag = 'scratch operand']
  #allocation4 [shape = 'f32[1,1]{1,0:T(1,128)S(1)}', space=vmem, size = 0x200, scoped, tag = 'scoped memory for decoder_forward.2']
  %s0 = inlined_call_operand.vmem [shape: bf16[2,16,32], index: 0, kind: input, shape index: {}]
  %s1 = inlined_call_operand.vmem [shape: bf16[2,16,32], index: 1, kind: input, shape index: {}]
  %s2 = inlined_call_operand.vmem [shape: f32[2,32], index: 2, kind: input, shape index: {}]
  %s3 = inlined_call_operand.vmem [shape: f32[2,32], index: 3, kind: input, shape index: {}]
  %s4 = inlined_call_operand.vmem [shape: f32[8,2,128], index: 4, kind: input, shape index: {}]
  %s5 = inlined_call_operand.vmem [shape: bf16[32,192], index: 5, kind: input, shape index: {}]
  %s6 = inlined_call_operand.vmem [shape: f32[1,192], index: 6, kind: input, shape index: {}]
  %s7 = inlined_call_operand.vmem [shape: bf16[32,128], index: 7, kind: input, shape index: {}]
  %s8 = inlined_call_operand.vmem [shape: f32[1,32], index: 8, kind: input, shape index: {}]
  %s9 = inlined_call_operand.<no memory space> [shape: f32[1,1], index: 9, kind: input, shape index: {}]
  %s10 = inlined_call_operand.vmem [shape: bf16[8,2,32], index: 10, kind: output, shape index: {0}]
  %s11 = inlined_call_operand.vmem [shape: f32[8,2,16], index: 11, kind: output, shape index: {1}]
  %12 = xla_tuple %s10, %s11
  %s13 = sld [smem:[#allocation0]]
  $region85: #{decoder_forward.2} parent=0
    _
  %s15 = ssub.s32 1, %s13
  %s16 = scalar_select 0, %s15, %s13
  %v17 = vstv %s9
  %18 = vst [vmem:[#allocation4] sm:$0x1] %v17
  loop: start=0, step=1, limit=10
  $region2: #{decoder_forward.2} parent=0 // loop_pre_header
    _
  $region3: #{decoder_forward.2} parent=0 // loop_header
    %s20 = sphi 0, %s24
    %p21 = scmp.ge.s32.totalorder %s20, 10
    %s27 = sphi 0, %s39
    %s28 = sphi 0, %s35
    %s29 = sphi 0, %s27
    %s30 = sphi 0, %s28
    %s31 = sphi 0, %s29
    %s32 = sphi 0, %s30
    %s42 = sphi 0, %s44
    %s45 = sphi 0, %s42
    %s46 = sphi 0, %s45
    %s62 = sphi 0, %s46
    %s68 = sphi 0, %s70
    %s71 = sphi 0, %s68
    %s72 = sphi 0, %s71
    %s88 = sphi 0, %s72
    %s94 = sphi 0, %s96
    %s97 = sphi 0, %s94
    %s98 = sphi 0, %s97
    %s114 = sphi 0, %s98
    %s120 = sphi 0, %s122
    %s123 = sphi 0, %s120
    %s124 = sphi 0, %s123
    %s140 = sphi 0, %s124
    %s148 = sphi 0, %s150
    %s151 = sphi 0, %s148
    %s152 = sphi 0, %s151
    %s168 = sphi 0, %s152
    %s172 = sphi 0, %s172
    %s174 = sphi 0, %s172
    %s175 = sphi 0, %s174
    %s189 = sphi 0, %s175
    %s193 = sphi 0, %s193
    %s195 = sphi 0, %s193
    %s196 = sphi 0, %s195
    %s210 = sphi 0, %s196
    %s214 = sphi 0, %s214
    %s216 = sphi 0, %s214
    %s217 = sphi 0, %s216
    %s231 = sphi 0, %s217
    %s235 = sphi 0, %s235
    %s237 = sphi 0, %s235
    %s238 = sphi 0, %s237
    %s252 = sphi 0, %s238
    %s256 = sphi 0, %s256
    %s258 = sphi 0, %s256
    %s259 = sphi 0, %s258
    %s273 = sphi 0, %s259
    %s281 = sphi 0, %s283
    %s284 = sphi 0, %s281
    %s285 = sphi 0, %s284
    %s301 = sphi 0, %s285
    %s309 = sphi 0, %s311
    %s312 = sphi 0, %s309
    %s313 = sphi 0, %s312
    %s329 = sphi 0, %s313
  $region4: #{decoder_forward.2} parent=0 // loop_header_branch
    %23 = sbr.rel (%p21) target = $region8
  $region5: #{decoder_forward.2} parent=0 // loop_body
    %s25 = ssub.s32 %s20, 1
    %s26 = ssub.s32 %s20, 2
    %s33 = sadd.s32 1, %s28
    %p34 = scmp.ge.s32.totalorder %s33, 8
    %s35 = scalar_select %p34, 0, %s33
    %s36 = sadd.s32 1, %s27
    %s37 = scalar_select %p34, %s36, %s27
    %p38 = scmp.ge.s32.totalorder %s37, 1
    %s39 = scalar_select %p38, 0, %s37
    %s40 = ssub.s32 %s27, %s39
    %p41 = scmp.eq.s32.totalorder %s40, 0
    %s43 = sadd.s32 %s42, 1
    %s44 = scalar_select %p41, %s42, %s43
    %p47 = pneg %p41
    %p48 = scmp.eq.s32.totalorder %s20, 7
    %p49 = por %p47, %p48
    %p50 = scmp.ne.s32.totalorder %s42, %s45
    %p51 = scmp.eq.s32.totalorder %s20, 0
    %p52 = por %p50, %p51
    %p53 = scmp.ne.s32.totalorder %s42, %s45
    %p54 = scmp.eq.s32.totalorder %s25, 7
    %p55 = por %p53, %p54
    %p56 = scmp.ne.s32.totalorder %s45, %s46
    %p57 = scmp.eq.s32.totalorder %s25, 0
    %p58 = por %p56, %p57
    %p59 = scmp.ne.s32.totalorder %s45, %s46
    %p60 = scmp.eq.s32.totalorder %s26, 7
    %p61 = por %p59, %p60
    %p63 = scmp.ne.s32.totalorder %s46, %s62
    %p64 = scmp.eq.s32.totalorder %s26, 0
    %p65 = por %p63, %p64
    %s66 = ssub.s32 %s27, %s39
    %p67 = scmp.eq.s32.totalorder %s66, 0
    %s69 = sadd.s32 %s68, 1
    %s70 = scalar_select %p67, %s68, %s69
    %p73 = pneg %p67
    %p74 = scmp.eq.s32.totalorder %s20, 7
    %p75 = por %p73, %p74
    %p76 = scmp.ne.s32.totalorder %s68, %s71
    %p77 = scmp.eq.s32.totalorder %s20, 0
    %p78 = por %p76, %p77
    %p79 = scmp.ne.s32.totalorder %s68, %s71
    %p80 = scmp.eq.s32.totalorder %s25, 7
    %p81 = por %p79, %p80
    %p82 = scmp.ne.s32.totalorder %s71, %s72
    %p83 = scmp.eq.s32.totalorder %s25, 0
    %p84 = por %p82, %p83
    %p85 = scmp.ne.s32.totalorder %s71, %s72
    %p86 = scmp.eq.s32.totalorder %s26, 7
    %p87 = por %p85, %p86
    %p89 = scmp.ne.s32.totalorder %s72, %s88
    %p90 = scmp.eq.s32.totalorder %s26, 0
    %p91 = por %p89, %p90
    %s92 = ssub.s32 %s27, %s39
    %p93 = scmp.eq.s32.totalorder %s92, 0
    %s95 = sadd.s32 %s94, 1
    %s96 = scalar_select %p93, %s94, %s95
    %p99 = pneg %p93
    %p100 = scmp.eq.s32.totalorder %s20, 7
    %p101 = por %p99, %p100
    %p102 = scmp.ne.s32.totalorder %s94, %s97
    %p103 = scmp.eq.s32.totalorder %s20, 0
    %p104 = por %p102, %p103
    %p105 = scmp.ne.s32.totalorder %s94, %s97
    %p106 = scmp.eq.s32.totalorder %s25, 7
    %p107 = por %p105, %p106
    %p108 = scmp.ne.s32.totalorder %s97, %s98
    %p109 = scmp.eq.s32.totalorder %s25, 0
    %p110 = por %p108, %p109
    %p111 = scmp.ne.s32.totalorder %s97, %s98
    %p112 = scmp.eq.s32.totalorder %s26, 7
    %p113 = por %p111, %p112
    %p115 = scmp.ne.s32.totalorder %s98, %s114
    %p116 = scmp.eq.s32.totalorder %s26, 0
    %p117 = por %p115, %p116
    %s118 = ssub.s32 %s27, %s39
    %p119 = scmp.eq.s32.totalorder %s118, 0
    %s121 = sadd.s32 %s120, 1
    %s122 = scalar_select %p119, %s120, %s121
    %p125 = pneg %p119
    %p126 = scmp.eq.s32.totalorder %s20, 7
    %p127 = por %p125, %p126
    %p128 = scmp.ne.s32.totalorder %s120, %s123
    %p129 = scmp.eq.s32.totalorder %s20, 0
    %p130 = por %p128, %p129
    %p131 = scmp.ne.s32.totalorder %s120, %s123
    %p132 = scmp.eq.s32.totalorder %s25, 7
    %p133 = por %p131, %p132
    %p134 = scmp.ne.s32.totalorder %s123, %s124
    %p135 = scmp.eq.s32.totalorder %s25, 0
    %p136 = por %p134, %p135
    %p137 = scmp.ne.s32.totalorder %s123, %s124
    %p138 = scmp.eq.s32.totalorder %s26, 7
    %p139 = por %p137, %p138
    %p141 = scmp.ne.s32.totalorder %s124, %s140
    %p142 = scmp.eq.s32.totalorder %s26, 0
    %p143 = por %p141, %p142
    %s144 = ssub.s32 %s28, %s35
    %s145 = ssub.s32 %s27, %s39
    %s146 = sor.u32 %s144, %s145
    %p147 = scmp.eq.s32.totalorder %s146, 0
    %s149 = sadd.s32 %s148, 1
    %s150 = scalar_select %p147, %s148, %s149
    %p153 = pneg %p147
    %p154 = scmp.eq.s32.totalorder %s20, 7
    %p155 = por %p153, %p154
    %p156 = scmp.ne.s32.totalorder %s148, %s151
    %p157 = scmp.eq.s32.totalorder %s20, 0
    %p158 = por %p156, %p157
    %p159 = scmp.ne.s32.totalorder %s148, %s151
    %p160 = scmp.eq.s32.totalorder %s25, 7
    %p161 = por %p159, %p160
    %p162 = scmp.ne.s32.totalorder %s151, %s152
    %p163 = scmp.eq.s32.totalorder %s25, 0
    %p164 = por %p162, %p163
    %p165 = scmp.ne.s32.totalorder %s151, %s152
    %p166 = scmp.eq.s32.totalorder %s26, 7
    %p167 = por %p165, %p166
    %p169 = scmp.ne.s32.totalorder %s152, %s168
    %p170 = scmp.eq.s32.totalorder %s26, 0
    %p171 = por %p169, %p170
    %s173 = sadd.s32 %s172, 1
    %p176 = scmp.eq.s32.totalorder %s20, 7
    %p177 = scmp.ne.s32.totalorder %s172, %s174
    %p178 = scmp.eq.s32.totalorder %s20, 0
    %p179 = por %p177, %p178
    %p180 = scmp.ne.s32.totalorder %s172, %s174
    %p181 = scmp.eq.s32.totalorder %s25, 7
    %p182 = por %p180, %p181
    %p183 = scmp.ne.s32.totalorder %s174, %s175
    %p184 = scmp.eq.s32.totalorder %s25, 0
    %p185 = por %p183, %p184
    %p186 = scmp.ne.s32.totalorder %s174, %s175
    %p187 = scmp.eq.s32.totalorder %s26, 7
    %p188 = por %p186, %p187
    %p190 = scmp.ne.s32.totalorder %s175, %s189
    %p191 = scmp.eq.s32.totalorder %s26, 0
    %p192 = por %p190, %p191
    %s194 = sadd.s32 %s193, 1
    %p197 = scmp.eq.s32.totalorder %s20, 7
    %p198 = scmp.ne.s32.totalorder %s193, %s195
    %p199 = scmp.eq.s32.totalorder %s20, 0
    %p200 = por %p198, %p199
    %p201 = scmp.ne.s32.totalorder %s193, %s195
    %p202 = scmp.eq.s32.totalorder %s25, 7
    %p203 = por %p201, %p202
    %p204 = scmp.ne.s32.totalorder %s195, %s196
    %p205 = scmp.eq.s32.totalorder %s25, 0
    %p206 = por %p204, %p205
    %p207 = scmp.ne.s32.totalorder %s195, %s196
    %p208 = scmp.eq.s32.totalorder %s26, 7
    %p209 = por %p207, %p208
    %p211 = scmp.ne.s32.totalorder %s196, %s210
    %p212 = scmp.eq.s32.totalorder %s26, 0
    %p213 = por %p211, %p212
    %s215 = sadd.s32 %s214, 1
    %p218 = scmp.eq.s32.totalorder %s20, 7
    %p219 = scmp.ne.s32.totalorder %s214, %s216
    %p220 = scmp.eq.s32.totalorder %s20, 0
    %p221 = por %p219, %p220
    %p222 = scmp.ne.s32.totalorder %s214, %s216
    %p223 = scmp.eq.s32.totalorder %s25, 7
    %p224 = por %p222, %p223
    %p225 = scmp.ne.s32.totalorder %s216, %s217
    %p226 = scmp.eq.s32.totalorder %s25, 0
    %p227 = por %p225, %p226
    %p228 = scmp.ne.s32.totalorder %s216, %s217
    %p229 = scmp.eq.s32.totalorder %s26, 7
    %p230 = por %p228, %p229
    %p232 = scmp.ne.s32.totalorder %s217, %s231
    %p233 = scmp.eq.s32.totalorder %s26, 0
    %p234 = por %p232, %p233
    %s236 = sadd.s32 %s235, 1
    %p239 = scmp.eq.s32.totalorder %s20, 7
    %p240 = scmp.ne.s32.totalorder %s235, %s237
    %p241 = scmp.eq.s32.totalorder %s20, 0
    %p242 = por %p240, %p241
    %p243 = scmp.ne.s32.totalorder %s235, %s237
    %p244 = scmp.eq.s32.totalorder %s25, 7
    %p245 = por %p243, %p244
    %p246 = scmp.ne.s32.totalorder %s237, %s238
    %p247 = scmp.eq.s32.totalorder %s25, 0
    %p248 = por %p246, %p247
    %p249 = scmp.ne.s32.totalorder %s237, %s238
    %p250 = scmp.eq.s32.totalorder %s26, 7
    %p251 = por %p249, %p250
    %p253 = scmp.ne.s32.totalorder %s238, %s252
    %p254 = scmp.eq.s32.totalorder %s26, 0
    %p255 = por %p253, %p254
    %s257 = sadd.s32 %s256, 1
    %p260 = scmp.eq.s32.totalorder %s20, 7
    %p261 = scmp.ne.s32.totalorder %s256, %s258
    %p262 = scmp.eq.s32.totalorder %s20, 0
    %p263 = por %p261, %p262
    %p264 = scmp.ne.s32.totalorder %s256, %s258
    %p265 = scmp.eq.s32.totalorder %s25, 7
    %p266 = por %p264, %p265
    %p267 = scmp.ne.s32.totalorder %s258, %s259
    %p268 = scmp.eq.s32.totalorder %s25, 0
    %p269 = por %p267, %p268
    %p270 = scmp.ne.s32.totalorder %s258, %s259
    %p271 = scmp.eq.s32.totalorder %s26, 7
    %p272 = por %p270, %p271
    %p274 = scmp.ne.s32.totalorder %s259, %s273
    %p275 = scmp.eq.s32.totalorder %s26, 0
    %p276 = por %p274, %p275
    %s277 = ssub.s32 %s28, %s35
    %s278 = ssub.s32 %s27, %s39
    %s279 = sor.u32 %s277, %s278
    %p280 = scmp.eq.s32.totalorder %s279, 0
    %s282 = sadd.s32 %s281, 1
    %s283 = scalar_select %p280, %s281, %s282
    %p286 = pneg %p280
    %p287 = scmp.eq.s32.totalorder %s20, 7
    %p288 = por %p286, %p287
    %p289 = scmp.ne.s32.totalorder %s281, %s284
    %p290 = scmp.eq.s32.totalorder %s20, 0
    %p291 = por %p289, %p290
    %p292 = scmp.ne.s32.totalorder %s281, %s284
    %p293 = scmp.eq.s32.totalorder %s25, 7
    %p294 = por %p292, %p293
    %p295 = scmp.ne.s32.totalorder %s284, %s285
    %p296 = scmp.eq.s32.totalorder %s25, 0
    %p297 = por %p295, %p296
    %p298 = scmp.ne.s32.totalorder %s284, %s285
    %p299 = scmp.eq.s32.totalorder %s26, 7
    %p300 = por %p298, %p299
    %p302 = scmp.ne.s32.totalorder %s285, %s301
    %p303 = scmp.eq.s32.totalorder %s26, 0
    %p304 = por %p302, %p303
    %s305 = ssub.s32 %s28, %s35
    %s306 = ssub.s32 %s27, %s39
    %s307 = sor.u32 %s305, %s306
    %p308 = scmp.eq.s32.totalorder %s307, 0
    %s310 = sadd.s32 %s309, 1
    %s311 = scalar_select %p308, %s309, %s310
    %p314 = pneg %p308
    %p315 = scmp.eq.s32.totalorder %s20, 7
    %p316 = por %p314, %p315
    %p317 = scmp.ne.s32.totalorder %s309, %s312
    %p318 = scmp.eq.s32.totalorder %s20, 0
    %p319 = por %p317, %p318
    %p320 = scmp.ne.s32.totalorder %s309, %s312
    %p321 = scmp.eq.s32.totalorder %s25, 7
    %p322 = por %p320, %p321
    %p323 = scmp.ne.s32.totalorder %s312, %s313
    %p324 = scmp.eq.s32.totalorder %s25, 0
    %p325 = por %p323, %p324
    %p326 = scmp.ne.s32.totalorder %s312, %s313
    %p327 = scmp.eq.s32.totalorder %s26, 7
    %p328 = por %p326, %p327
    %p330 = scmp.ne.s32.totalorder %s313, %s329
    %p331 = scmp.eq.s32.totalorder %s26, 0
    %p332 = por %p330, %p331
    %p333 = scmp.le.s32.totalorder 1, %s20
    %p334 = scmp.lt.s32.totalorder %s20, 9
    %p335 = pnand %p333, %p334
    %p336 = pneg %p335
    // Predicated region
    $region9: #{decoder_forward.2} parent=5 // pred_check
      _
    $region10: #{decoder_forward.2} parent=5 // pred_check_branch
      %338 = sbr.rel (%p335) target = $region12
    $region11: #{decoder_forward.2} parent=5 // pred_region
      %s339 = ssub.s32 %s20, 1
      // Predicated region
      $region13: #{decoder_forward.2} parent=11 // pred_check
        %p340 = pneg %p58
      $region14: #{decoder_forward.2} parent=11 // pred_check_branch
        %342 = sbr.rel (%p340) target = $region16
      $region15: #{decoder_forward.2} parent=11 // pred_region
        %s343 = smul.u32 2, %s29
        %p344 = scmp.lt.s32.totalorder %s343, 1
        %s345 = scalar_select %p344, %s343, 1
        %s346 = smul.addr %s345, 2
        %s347 = smul.addr %s346, 4
        %s348 = scalar_lea.vmem %s0, %s347
        %s349 = smul.u32 2, %s29
      $region16: #{decoder_forward.2} parent=11 // pred_fallthru
        _
      // Predicated region
      $region17: #{decoder_forward.2} parent=11 // pred_check
        %p350 = pneg %p84
      $region18: #{decoder_forward.2} parent=11 // pred_check_branch
        %352 = sbr.rel (%p350) target = $region20
      $region19: #{decoder_forward.2} parent=11 // pred_region
        %s353 = smul.u32 2, %s29
        %p354 = scmp.lt.s32.totalorder %s353, 1
        %s355 = scalar_select %p354, %s353, 1
        %s356 = smul.addr %s355, 2
        %s357 = smul.addr %s356, 4
        %s358 = scalar_lea.vmem %s1, %s357
        %s359 = smul.u32 2, %s29
      $region20: #{decoder_forward.2} parent=11 // pred_fallthru
        _
      // Predicated region
      $region21: #{decoder_forward.2} parent=11 // pred_check
        %p360 = pneg %p110
      $region22: #{decoder_forward.2} parent=11 // pred_check_branch
        %362 = sbr.rel (%p360) target = $region24
      $region23: #{decoder_forward.2} parent=11 // pred_region
        %p363 = scmp.lt.s32.totalorder %s29, 0
        %s364 = scalar_select %p363, %s29, 0
        %s365 = smul.addr %s364, 2
        %s366 = scalar_lea.vmem %s2, %s365
      $region24: #{decoder_forward.2} parent=11 // pred_fallthru
        _
      // Predicated region
      $region25: #{decoder_forward.2} parent=11 // pred_check
        %p367 = pneg %p136
      $region26: #{decoder_forward.2} parent=11 // pred_check_branch
        %369 = sbr.rel (%p367) target = $region28
      $region27: #{decoder_forward.2} parent=11 // pred_region
        %p370 = scmp.lt.s32.totalorder %s29, 0
        %s371 = scalar_select %p370, %s29, 0
        %s372 = smul.addr %s371, 2
        %s373 = scalar_lea.vmem %s3, %s372
      $region28: #{decoder_forward.2} parent=11 // pred_fallthru
        _
      // Predicated region
      $region29: #{decoder_forward.2} parent=11 // pred_check
        %p374 = pneg %p185
      $region30: #{decoder_forward.2} parent=11 // pred_check_branch
        %376 = sbr.rel (%p374) target = $region32
      $region31: #{decoder_forward.2} parent=11 // pred_region
        _
      $region32: #{decoder_forward.2} parent=11 // pred_fallthru
        _
      // Predicated region
      $region33: #{decoder_forward.2} parent=11 // pred_check
        %p377 = pneg %p206
      $region34: #{decoder_forward.2} parent=11 // pred_check_branch
        %379 = sbr.rel (%p377) target = $region36
      $region35: #{decoder_forward.2} parent=11 // pred_region
        _
      $region36: #{decoder_forward.2} parent=11 // pred_fallthru
        _
      // Predicated region
      $region37: #{decoder_forward.2} parent=11 // pred_check
        %p380 = pneg %p227
      $region38: #{decoder_forward.2} parent=11 // pred_check_branch
        %382 = sbr.rel (%p380) target = $region40
      $region39: #{decoder_forward.2} parent=11 // pred_region
        _
      $region40: #{decoder_forward.2} parent=11 // pred_fallthru
        _
      // Predicated region
      $region41: #{decoder_forward.2} parent=11 // pred_check
        %p383 = pneg %p248
      $region42: #{decoder_forward.2} parent=11 // pred_check_branch
        %385 = sbr.rel (%p383) target = $region44
      $region43: #{decoder_forward.2} parent=11 // pred_region
        _
      $region44: #{decoder_forward.2} parent=11 // pred_fallthru
        _
      // Predicated region
      $region45: #{decoder_forward.2} parent=11 // pred_check
        %p386 = pneg %p269
      $region46: #{decoder_forward.2} parent=11 // pred_check_branch
        %388 = sbr.rel (%p386) target = $region48
      $region47: #{decoder_forward.2} parent=11 // pred_region
        _
      $region48: #{decoder_forward.2} parent=11 // pred_fallthru
        _
    $region12: #{decoder_forward.2} parent=5 // pred_fallthru
      _
    %p389 = scmp.lt.s32.totalorder %s20, 8
    // Predicated region
    $region49: #{decoder_forward.2} parent=5 // pred_check
      %p390 = pneg %p389
    $region50: #{decoder_forward.2} parent=5 // pred_check_branch
      %392 = sbr.rel (%p390) target = $region52
    $region51: #{decoder_forward.2} parent=5 // pred_region
      // Predicated region
      $region53: #{decoder_forward.2} parent=51 // pred_check
        %p393 = pneg %p158
      $region54: #{decoder_forward.2} parent=51 // pred_check_branch
        %395 = sbr.rel (%p393) target = $region56
      $region55: #{decoder_forward.2} parent=51 // pred_region
        %p396 = scmp.lt.s32.totalorder %s28, 7
        %s397 = scalar_select %p396, %s28, 7
        %p398 = scmp.lt.s32.totalorder %s27, 0
        %s399 = scalar_select %p398, %s27, 0
        %s400 = sadd.s32 %s399, %s397
        %s401 = smul.addr %s400, 2
        %s402 = scalar_lea.vmem %s4, %s401
      $region56: #{decoder_forward.2} parent=51 // pred_fallthru
        _
    $region52: #{decoder_forward.2} parent=5 // pred_fallthru
      _
    %p403 = scmp.le.s32.totalorder 1, %s20
    %p404 = scmp.lt.s32.totalorder %s20, 9
    %p405 = pnand %p403, %p404
    %p406 = pneg %p405
    // Predicated region
    $region57: #{decoder_forward.2} parent=5 // pred_check
      _
    $region58: #{decoder_forward.2} parent=5 // pred_check_branch
      %408 = sbr.rel (%p405) target = $region60
    $region59: #{decoder_forward.2} parent=5 // pred_region
      %s409 = ssub.s32 %s20, 1
      %s410 = smul.u32 2, %s29
      %p411 = scmp.lt.s32.totalorder %s410, 1
      %s412 = scalar_select %p411, %s410, 1
      %s413 = smul.addr %s412, 2
      %s414 = smul.addr %s413, 4
      %s415 = scalar_lea.vmem %s0, %s414
      %p416 = pneg %p58
      %p417 = pneg %p55
      %s418 = smul.u32 2, %s29
      %p419 = scmp.lt.s32.totalorder %s418, 1
      %s420 = scalar_select %p419, %s418, 1
      %s421 = smul.addr %s420, 2
      %s422 = smul.addr %s421, 4
      %s423 = scalar_lea.vmem %s1, %s422
      %p424 = pneg %p84
      %p425 = pneg %p81
      %p426 = scmp.lt.s32.totalorder %s29, 0
      %s427 = scalar_select %p426, %s29, 0
      %s428 = smul.addr %s427, 2
      %s429 = scalar_lea.vmem %s2, %s428
      %p430 = pneg %p110
      %p431 = pneg %p107
      %p432 = scmp.lt.s32.totalorder %s29, 0
      %s433 = scalar_select %p432, %s29, 0
      %s434 = smul.addr %s433, 2
      %s435 = scalar_lea.vmem %s3, %s434
      %p436 = pneg %p136
      %p437 = pneg %p133
      %p438 = scmp.lt.s32.totalorder %s30, 7
      %s439 = scalar_select %p438, %s30, 7
      %p440 = scmp.lt.s32.totalorder %s29, 0
      %s441 = scalar_select %p440, %s29, 0
      %s442 = sadd.s32 %s441, %s439
      %s443 = smul.addr %s442, 2
      %s444 = scalar_lea.vmem %s4, %s443
      %p445 = pneg %p164
      %p446 = pneg %p161
      %p447 = pneg %p185
      %p448 = pneg %p182
      %p449 = pneg %p206
      %p450 = pneg %p203
      %p451 = pneg %p227
      %p452 = pneg %p224
      %p453 = pneg %p248
      %p454 = pneg %p245
      %p455 = pneg %p269
      %p456 = pneg %p266
      %p457 = pneg %p297
      %p458 = pneg %p294
      %p459 = scmp.lt.s32.totalorder %s30, 7
      %s460 = scalar_select %p459, %s30, 7
      %p461 = scmp.lt.s32.totalorder %s29, 0
      %s462 = scalar_select %p461, %s29, 0
      %s463 = sadd.s32 %s462, %s460
      %s464 = scalar_lea.vmem %s10, %s463
      %p465 = pneg %p325
      %p466 = pneg %p322
      %p467 = scmp.lt.s32.totalorder %s30, 7
      %s468 = scalar_select %p467, %s30, 7
      %p469 = scmp.lt.s32.totalorder %s29, 0
      %s470 = scalar_select %p469, %s29, 0
      %s471 = sadd.s32 %s470, %s468
      %s472 = smul.addr %s471, 2
      %s473 = scalar_lea.vmem %s11, %s472
      %s474 = smul.u32 2, %s29
      %p475 = scmp.lt.s32.totalorder %s474, 1
      %s476 = scalar_select %p475, %s474, 1
      %s477 = smul.addr %s476, 2
      %s478 = smul.addr %s477, 4
      %s479 = scalar_lea.vmem %s0, %s478
      %s480 = smul.u32 2, %s29
      %s481 = smul.u32 2, %s29
      %p482 = scmp.lt.s32.totalorder %s481, 1
      %s483 = scalar_select %p482, %s481, 1
      %s484 = smul.addr %s483, 2
      %s485 = smul.addr %s484, 4
      %s486 = scalar_lea.vmem %s1, %s485
      %s487 = smul.u32 2, %s29
      %p488 = scmp.lt.s32.totalorder %s29, 0
      %s489 = scalar_select %p488, %s29, 0
      %s490 = smul.addr %s489, 2
      %s491 = scalar_lea.vmem %s2, %s490
      %p492 = scmp.lt.s32.totalorder %s29, 0
      %s493 = scalar_select %p492, %s29, 0
      %s494 = smul.addr %s493, 2
      %s495 = scalar_lea.vmem %s3, %s494
      %p496 = scmp.lt.s32.totalorder %s30, 7
      %s497 = scalar_select %p496, %s30, 7
      %p498 = scmp.lt.s32.totalorder %s29, 0
      %s499 = scalar_select %p498, %s29, 0
      %s500 = sadd.s32 %s499, %s497
      %s501 = smul.addr %s500, 2
      %s502 = scalar_lea.vmem %s4, %s501
      %p503 = scmp.lt.s32.totalorder %s30, 7
      %s504 = scalar_select %p503, %s30, 7
      %p505 = scmp.lt.s32.totalorder %s29, 0
      %s506 = scalar_select %p505, %s29, 0
      %s507 = sadd.s32 %s506, %s504
      %s508 = scalar_lea.vmem %s10, %s507
      %p509 = scmp.lt.s32.totalorder %s30, 7
      %s510 = scalar_select %p509, %s30, 7
      %p511 = scmp.lt.s32.totalorder %s29, 0
      %s512 = scalar_select %p511, %s29, 0
      %s513 = sadd.s32 %s512, %s510
      %s514 = smul.addr %s513, 2
      %s515 = scalar_lea.vmem %s11, %s514
      %p517 = scmp.eq.s32.totalorder %s30, 0
      // Predicated region
      $region61: #{decoder_forward.2} parent=59 // pred_check
        %p518 = pneg %p517
      $region62: #{decoder_forward.2} parent=59 // pred_check_branch
        %520 = sbr.rel (%p518) target = $region64
      $region63: #{decoder_forward.2} parent=59 // pred_region
        %v521 = vld [vmem:[%s491] sm:$0x3]
        %vm522 = vcmask 254976
        %523 = vst.msk [vmem:[#allocation2] sm:$0x3] %vm522, %v521
        %v524 = vld [vmem:[%s495] sm:$0x3]
        %525 = vst.msk [vmem:[#allocation3] sm:$0x3] %vm522, %v524
      $region64: #{decoder_forward.2} parent=59 // pred_fallthru
        _
      %v526 = vld [vmem:[#allocation2] sm:$0x3]
      %v527 = vld [vmem:[#allocation3] sm:$0x3]
      %v528 = vpack.c.bf16 %v526, %v526
      %v529 = vld [vmem:[%s5] sm:$0xff]
      %v530 = vld [vmem:[%s5 + $0x8] sm:$0xff]
      %v531 = vld [vmem:[%s5 + $0x10] sm:$0xff]
      %v532 = vld [vmem:[%s5 + $0x18] sm:$0xff]
      %v533 = vld [vmem:[%s6] sm:$0x3]
      %v535 = vperm.slane %v533, 0
      %v536 = vperm.slane %v533, 1
      %v543 = vunpack.c.l.b16 %v529
      %v544 = vunpack.c.h.b16 %v529
      %v545 = vunpack.c.l.b16 %v530
      %v546 = vunpack.c.h.b16 %v530
      %v547 = vunpack.c.l.b16 %v531
      %v548 = vunpack.c.h.b16 %v531
      %v549 = vunpack.c.l.b16 %v532
      %v550 = vunpack.c.h.b16 %v532
      %v551 = vpack.c.b16 %v545, %v543
      %v552 = vpack.c.b16 %v546, %v544
      %v553 = vpack.c.b16 %v549, %v547
      %v554 = vpack.c.b16 %v550, %v548
      %vm559 = vcmask 261120
      %v561 = vsel %vm559, %v528, 0
      %563 = vmatpush.bf16.msra.mxu0 0
      %564 = vmatpush.bf16.msra.mxu0 0
      %565 = vmatpush.bf16.msra.mxu0 0
      %566 = vmatpush.bf16.msra.mxu0 0
      %567 = vmatpush.bf16.msra.mxu0 0
      %568 = vmatpush.bf16.msra.mxu0 0
      %569 = vmatpush.bf16.msra.mxu0 %v553
      %570 = vmatpush.bf16.msra.mxu0 %v551
      %571 = vmatmul.bf16.gmra.mxu0 %v561
      %v572 = vpop.f32.mrf.mxu0
      %v573 = vadd.f32 %v535, %v572
      %v574 = vpop.f32.mrf.mxu0
      %575 = vdwg.mxu0
      %576 = vmatpush.bf16.msra.mxu0 0
      %577 = vmatpush.bf16.msra.mxu0 0
      %578 = vmatpush.bf16.msra.mxu0 0
      %579 = vmatpush.bf16.msra.mxu0 0
      %580 = vmatpush.bf16.msra.mxu0 0
      %581 = vmatpush.bf16.msra.mxu0 0
      %582 = vmatpush.bf16.msra.mxu0 %v554
      %583 = vmatpush.bf16.msra.mxu0 %v552
      %584 = vmatmul.bf16.gmra.mxu0 %v561
      %v585 = vpop.f32.mrf.mxu0
      %v586 = vadd.f32 %v536, %v585
      %v587 = vpop.f32.mrf.mxu0
      %588 = vdwg.mxu0
      %v589 = vld [vmem:[%s486] sm:$0xf]
      %v590 = vld [vmem:[%s486 + $0x4] sm:$0xf]
      %v591 = vld [vmem:[%s486 + $0x8] sm:$0xf]
      %v592 = vld [vmem:[%s486 + $0xc] sm:$0xf]
      %v593 = vunpack.c.l.bf16 %v589
      %v594 = vunpack.c.l.bf16 %v590
      %v595 = vunpack.c.l.bf16 %v591
      %v596 = vunpack.c.l.bf16 %v592
      %v598 = vrot.slane %v573, 1
      %v599 = vperm.slane %v573, 0
      %v600 = vperm.slane %v598, 0
      %v603 = vadd.f32 %v593, %v599
      %v604 = vadd.f32 %v594, %v599
      %v605 = vadd.f32 %v595, %v600
      %v606 = vadd.f32 %v596, %v600
      %v607 = vmax.f32 %v603, 0.0
      %v608 = vmax.f32 %v604, 0.0
      %v609 = vmax.f32 %v605, 0.0
      %v610 = vmax.f32 %v606, 0.0
      %v611 = vld [vmem:[%s8] sm:$0x1]
      %v613 = vperm.slane %v611, 0
      %v615 = vmul.f32 %v607, %v613
      %v616 = vmul.f32 %v608, %v613
      %v617 = vmul.f32 %v609, %v613
      %v618 = vmul.f32 %v610, %v613
      %v619 = vsel %vm559, %v615, 0.0
      %620 = vadd.xlane.f32.xlu0 %v619
      %v621 = vpop.xlane.xlu0 %620
      %v622 = vsel %vm559, %v616, 0.0
      %623 = vadd.xlane.f32.xlu0 %v622
      %v624 = vpop.xlane.xlu0 %623
      %v625 = vsel %vm559, %v617, 0.0
      %626 = vadd.xlane.f32.xlu0 %v625
      %v627 = vpop.xlane.xlu0 %626
      %v628 = vsel %vm559, %v618, 0.0
      %629 = vadd.xlane.f32.xlu0 %v628
      %v630 = vpop.xlane.xlu0 %629
      %v631 = vld [vmem:[#allocation4] sm:$0x1]
      %v633 = vperm.slane %v631, 0
      %634 = vset.pattern.permute.xlu0 0
      %635 = vperm.xlu0 %634, %v633
      %v636 = vpop.permute.xlu0 %635
      %v638 = vadd.f32 %v621, %v636
      %v639 = vadd.f32 %v624, %v636
      %v640 = vadd.f32 %v627, %v636
      %v641 = vadd.f32 %v630, %v636
      %v646 = vlaneseq
      %v647 = vand.u32 %v646, 127
      %v648 = vperm.slane %v638, %v647
      %v649 = vadd.s32 %v647, 4294967288
      %v650 = vperm.slane %v639, %v649
      %vm651 = vcmask 130112
      %v652 = vsel %vm651, %v650, %v648
      %v653 = vperm.slane %v640, %v647
      %v654 = vperm.slane %v641, %v649
      %v655 = vsel %vm651, %v654, %v653
      %vm656 = vcmask 1041409
      %v657 = vsel %vm656, %v655, %v652
      %vm659 = vcmask 123904
      %v660 = vsel %vm659, %v657, -inf
      %661 = vmax.xlane.f32.xlu0 %v660
      %v662 = vpop.xlane.xlu0 %661
      %v664 = vperm.slane %v662, 0
      %v665 = vperm.slane %v662, 1
      %v668 = vsub.f32 %v638, %v664
      %v669 = vsub.f32 %v639, %v664
      %v670 = vsub.f32 %v640, %v665
      %v671 = vsub.f32 %v641, %v665
      %v672 = vmul.f32 %v668, 1.442695
      %v673 = vpow.pop %v672
      %v674 = vmul.f32 %v669, 1.442695
      %v675 = vpow.pop %v674
      %v676 = vmul.f32 %v670, 1.442695
      %v677 = vpow.pop %v676
      %v678 = vmul.f32 %v671, 1.442695
      %v679 = vpow.pop %v678
      %684 = vset.pattern.permute.xlu0 0
      %685 = vperm.xlu0 %684, %v673
      %v686 = vpop.permute.xlu0 %685
      %687 = vset.pattern.permute.xlu0 0
      %688 = vperm.xlu0 %687, %v675
      %v689 = vpop.permute.xlu0 %688
      %690 = vset.pattern.permute.xlu0 0
      %691 = vperm.xlu0 %690, %v677
      %v692 = vpop.permute.xlu0 %691
      %693 = vset.pattern.permute.xlu0 0
      %694 = vperm.xlu0 %693, %v679
      %v695 = vpop.permute.xlu0 %694
      %v696 = vperm.slane %v686, %v647
      %v697 = vperm.slane %v689, %v649
      %v698 = vsel %vm651, %v697, %v696
      %v699 = vperm.slane %v692, %v647
      %v700 = vperm.slane %v695, %v649
      %v701 = vsel %vm651, %v700, %v699
      %v702 = vsel %vm656, %v701, %v698
      %v704 = vsel %vm659, %v702, 0.0
      %705 = vadd.xlane.f32.xlu0 %v704
      %v706 = vpop.xlane.xlu0 %705
      %v707 = vrcp.pop %v706
      %v708 = vmul.f32 %v706, %v707
      %v709 = vsub.f32 1.0, %v708
      %v710 = vmul.f32 %v707, %v709
      %v711 = vadd.f32 %v707, %v710
      %vm712 = vweird.f32 %v706
      %vm713 = vweird.f32 %v707
      %vm714 = vmor %vm712, %vm713
      %v715 = vsel %vm714, %v707, %v711
      %v716 = vand.u32 2147483647, %v706
      %vm717 = vcmp.eq.f32.partialorder %v716, 8.507059e+37
      %v718 = vand.u32 %v706, 2147483648
      %v719 = vor.u32 1.1754944e-38, %v718
      %v720 = vsel %vm717, %v719, %v715
      %v722 = vperm.slane %v720, 0
      %v723 = vperm.slane %v720, 1
      %v726 = vmul.f32 %v673, %v722
      %v727 = vmul.f32 %v675, %v722
      %v728 = vmul.f32 %v677, %v723
      %v729 = vmul.f32 %v679, %v723
      %v730 = vld [vmem:[%s479] sm:$0xf]
      %v731 = vld [vmem:[%s479 + $0x4] sm:$0xf]
      %v732 = vld [vmem:[%s479 + $0x8] sm:$0xf]
      %v733 = vld [vmem:[%s479 + $0xc] sm:$0xf]
      %v734 = vunpack.c.l.bf16 %v730
      %v735 = vunpack.c.l.bf16 %v731
      %v736 = vunpack.c.l.bf16 %v732
      %v737 = vunpack.c.l.bf16 %v733
      %739 = vset.pattern.permute.xlu0 0
      %740 = vperm.xlu0 %739, %v726
      %v741 = vpop.permute.xlu0 %740
      %744 = vset.pattern.permute.xlu0 0
      %745 = vperm.xlu0 %744, %v727
      %v746 = vpop.permute.xlu0 %745
      %749 = vset.pattern.permute.xlu0 0
      %750 = vperm.xlu0 %749, %v728
      %v751 = vpop.permute.xlu0 %750
      %754 = vset.pattern.permute.xlu0 0
      %755 = vperm.xlu0 %754, %v729
      %v756 = vpop.permute.xlu0 %755
      %v758 = vmul.f32 %v734, %v741
      %v759 = vmul.f32 %v735, %v746
      %v760 = vmul.f32 %v736, %v751
      %v761 = vmul.f32 %v737, %v756
      %v762 = vsel %vm559, %v758, 0.0
      %v763 = vsel %vm559, %v759, 0.0
      %v764 = vadd.f32 %v762, %v763
      %v765 = vrot.slane %v764, 4
      %v766 = vadd.f32 %v764, %v765
      %v767 = vrot.slane %v766, 2
      %v768 = vadd.f32 %v766, %v767
      %v769 = vrot.slane %v768, 1
      %v770 = vadd.f32 %v768, %v769
      %v771 = vsel %vm559, %v760, 0.0
      %v772 = vsel %vm559, %v761, 0.0
      %v773 = vadd.f32 %v771, %v772
      %v774 = vrot.slane %v773, 4
      %v775 = vadd.f32 %v773, %v774
      %v776 = vrot.slane %v775, 2
      %v777 = vadd.f32 %v775, %v776
      %v778 = vrot.slane %v777, 1
      %v779 = vadd.f32 %v777, %v778
      %v780 = vxor.u32 %v573, 2147483648
      %v781 = vmul.f32 %v780, 1.442695
      %v782 = vpow.pop %v781
      %v783 = vadd.f32 %v782, 1.0
      %v784 = vrcp.pop %v783
      %v785 = vmul.f32 %v783, %v784
      %v786 = vsub.f32 1.0, %v785
      %v787 = vmul.f32 %v784, %v786
      %v788 = vadd.f32 %v784, %v787
      %vm789 = vweird.f32 %v783
      %vm790 = vweird.f32 %v784
      %vm791 = vmor %vm789, %vm790
      %v792 = vsel %vm791, %v784, %v788
      %v793 = vand.u32 2147483647, %v783
      %vm794 = vcmp.eq.f32.partialorder %v793, 8.507059e+37
      %v795 = vand.u32 %v783, 2147483648
      %v796 = vor.u32 1.1754944e-38, %v795
      %v797 = vsel %vm794, %v796, %v792
      %v798 = vmul.f32 1.0, %v797
      %v801 = vsel %vm656, %v779, %v770
      %802 = vrot.lane.b32.xlu0 %v801, 32
      %v803 = vpop.permute.xlu0 %802
      %v805 = vmul.f32 %v798, %v803
      %v806 = vld [vmem:[%s502] sm:$0x3]
      %808 = vrot.lane.b32.xlu0 %v573, 64
      %v809 = vpop.permute.xlu0 %808
      %810 = vrot.lane.b32.xlu0 %v586, 64
      %v811 = vpop.permute.xlu0 %810
      %vm812 = vcmask 523264
      %v813 = vsel %vm812, %v809, %v811
      %v815 = vadd.f32 %v806, %v813
      %v816 = vpack.c.bf16 %v805, %v805
      %v817 = vld [vmem:[%s7] sm:$0xf]
      %v818 = vld [vmem:[%s7 + $0x4] sm:$0xf]
      %v819 = vld [vmem:[%s7 + $0x8] sm:$0xf]
      %v820 = vld [vmem:[%s7 + $0xc] sm:$0xf]
      %822 = vrot.lane.b32.xlu0 %v816, 96
      %v823 = vpop.permute.xlu0 %822
      %v828 = vunpack.c.l.b16 %v817
      %v829 = vunpack.c.l.b16 %v818
      %v830 = vunpack.c.l.b16 %v819
      %v831 = vunpack.c.l.b16 %v820
      %v832 = vpack.c.b16 %v829, %v828
      %v833 = vpack.c.b16 %v831, %v830
      %v837 = vsel %vm559, %v823, 0
      %839 = vmatpush.bf16.msra.mxu0 0
      %840 = vmatpush.bf16.msra.mxu0 0
      %841 = vmatpush.bf16.msra.mxu0 0
      %842 = vmatpush.bf16.msra.mxu0 0
      %843 = vmatpush.bf16.msra.mxu0 0
      %844 = vmatpush.bf16.msra.mxu0 0
      %845 = vmatpush.bf16.msra.mxu0 %v833
      %846 = vmatpush.bf16.msra.mxu0 %v832
      %847 = vmatmul.bf16.gmra.mxu0 %v837
      %v848 = vpop.f32.mrf.mxu0
      %v849 = vadd.f32 0.0, %v848
      %v850 = vpop.f32.mrf.mxu0
      %851 = vdwg.mxu0
      %v852 = vadd.f32 %v815, %v849
      %v853 = vxor.u32 %v852, 2147483648
      %v854 = vmul.f32 %v853, 1.442695
      %v855 = vpow.pop %v854
      %v856 = vadd.f32 %v855, 1.0
      %v857 = vrcp.pop %v856
      %v858 = vmul.f32 %v856, %v857
      %v859 = vsub.f32 1.0, %v858
      %v860 = vmul.f32 %v857, %v859
      %v861 = vadd.f32 %v857, %v860
      %vm862 = vweird.f32 %v856
      %vm863 = vweird.f32 %v857
      %vm864 = vmor %vm862, %vm863
      %v865 = vsel %vm864, %v857, %v861
      %v866 = vand.u32 2147483647, %v856
      %vm867 = vcmp.eq.f32.partialorder %v866, 8.507059e+37
      %v868 = vand.u32 %v856, 2147483648
      %v869 = vor.u32 1.1754944e-38, %v868
      %v870 = vsel %vm867, %v869, %v865
      %v871 = vmul.f32 1.0, %v870
      %v872 = vtanh.pop %v852
      %874 = vrot.lane.b32.xlu0 %v527, 32
      %v875 = vpop.permute.xlu0 %874
      %v877 = vmul.f32 %v871, %v875
      %879 = vrot.lane.b32.xlu0 %v872, 64
      %v880 = vpop.permute.xlu0 %879
      %v882 = vmul.f32 %v871, %v880
      %884 = vrot.lane.b32.xlu0 %v882, 32
      %v885 = vpop.permute.xlu0 %884
      %v887 = vadd.f32 %v877, %v885
      %v888 = vtanh.pop %v887
      %890 = vrot.lane.b32.xlu0 %v888, 64
      %v891 = vpop.permute.xlu0 %890
      %v893 = vmul.f32 %v871, %v891
      %895 = vrot.lane.b32.xlu0 %v893, 32
      %v896 = vpop.permute.xlu0 %895
      %vm898 = vcmask 254976
      %899 = vst.msk [vmem:[#allocation2] sm:$0x3] %vm898, %v896
      %901 = vrot.lane.b32.xlu0 %v887, 96
      %v902 = vpop.permute.xlu0 %901
      %904 = vst.msk [vmem:[#allocation3] sm:$0x3] %vm898, %v902
      %v905 = vpack.c.bf16 %v893, %v893
      %v907 = vrot.slane %v905, 3
      %vm908 = vcmask 1040384
      %v911 = vsel %vm908, %v905, %v907
      %913 = vrot.lane.b32.xlu0 %v911, 32
      %v914 = vpop.permute.xlu0 %913
      %vm916 = vcmask 253952
      %917 = vst.msk [vmem:[%s508] sm:$0x1] %vm916, %v914
      %v918 = vperm.slane %v741, %v647
      %v919 = vperm.slane %v746, %v649
      %v920 = vsel %vm651, %v919, %v918
      %v921 = vperm.slane %v751, %v647
      %v922 = vperm.slane %v756, %v649
      %v923 = vsel %vm651, %v922, %v921
      %v924 = vsel %vm656, %v923, %v920
      %926 = vst.msk [vmem:[%s515] sm:$0x3] %vm659, %v924
      %p927 = scmp.lt.s32.totalorder %s30, 7
      %s928 = scalar_select %p927, %s30, 7
      %p929 = scmp.lt.s32.totalorder %s29, 0
      %s930 = scalar_select %p929, %s29, 0
      %s931 = sadd.s32 %s930, %s928
      %s932 = scalar_lea.vmem %s10, %s931
      %p933 = scmp.lt.s32.totalorder %s30, 7
      %s934 = scalar_select %p933, %s30, 7
      %p935 = scmp.lt.s32.totalorder %s29, 0
      %s936 = scalar_select %p935, %s29, 0
      %s937 = sadd.s32 %s936, %s934
      %s938 = smul.addr %s937, 2
      %s939 = scalar_lea.vmem %s11, %s938
      // Predicated region
      $region65: #{decoder_forward.2} parent=59 // pred_check
        %p940 = pneg %p294
      $region66: #{decoder_forward.2} parent=59 // pred_check_branch
        %942 = sbr.rel (%p940) target = $region68
      $region67: #{decoder_forward.2} parent=59 // pred_region
        _
      $region68: #{decoder_forward.2} parent=59 // pred_fallthru
        _
      // Predicated region
      $region69: #{decoder_forward.2} parent=59 // pred_check
        %p943 = pneg %p322
      $region70: #{decoder_forward.2} parent=59 // pred_check_branch
        %945 = sbr.rel (%p943) target = $region72
      $region71: #{decoder_forward.2} parent=59 // pred_region
        _
      $region72: #{decoder_forward.2} parent=59 // pred_fallthru
        _
    $region60: #{decoder_forward.2} parent=5 // pred_fallthru
      _
    %p946 = scmp.le.s32.totalorder 2, %s20
    // Predicated region
    $region73: #{decoder_forward.2} parent=5 // pred_check
      %p947 = pneg %p946
    $region74: #{decoder_forward.2} parent=5 // pred_check_branch
      %949 = sbr.rel (%p947) target = $region76
    $region75: #{decoder_forward.2} parent=5 // pred_region
      %s950 = ssub.s32 %s20, 2
      // Predicated region
      $region77: #{decoder_forward.2} parent=75 // pred_check
        %p951 = pneg %p300
      $region78: #{decoder_forward.2} parent=75 // pred_check_branch
        %953 = sbr.rel (%p951) target = $region80
      $region79: #{decoder_forward.2} parent=75 // pred_region
        %p954 = scmp.lt.s32.totalorder %s32, 7
        %s955 = scalar_select %p954, %s32, 7
        %p956 = scmp.lt.s32.totalorder %s31, 0
        %s957 = scalar_select %p956, %s31, 0
        %s958 = sadd.s32 %s957, %s955
        %s959 = scalar_lea.vmem %s10, %s958
      $region80: #{decoder_forward.2} parent=75 // pred_fallthru
        _
      // Predicated region
      $region81: #{decoder_forward.2} parent=75 // pred_check
        %p960 = pneg %p328
      $region82: #{decoder_forward.2} parent=75 // pred_check_branch
        %962 = sbr.rel (%p960) target = $region84
      $region83: #{decoder_forward.2} parent=75 // pred_region
        %p963 = scmp.lt.s32.totalorder %s32, 7
        %s964 = scalar_select %p963, %s32, 7
        %p965 = scmp.lt.s32.totalorder %s31, 0
        %s966 = scalar_select %p965, %s31, 0
        %s967 = sadd.s32 %s966, %s964
        %s968 = smul.addr %s967, 2
        %s969 = scalar_lea.vmem %s11, %s968
      $region84: #{decoder_forward.2} parent=75 // pred_fallthru
        _
    $region76: #{decoder_forward.2} parent=5 // pred_fallthru
      _
  $region6: #{decoder_forward.2} parent=0 // loop_footer
    %s24 = sadd.s32 1, %s20
  $region7: #{decoder_forward.2} parent=0 // loop_footer_branch
    %19 = sbr.rel target = $region3
  $region8: #{decoder_forward.2} parent=0 // loop_exit
    _

// kernel: decoder_forward.3
$region0: #{decoder_forward.3}
  #allocation0 [shape = 'u32[]', space=smem, size = 0x4, offset = 0x4, fixed_abs, tag = 'smem constant byte address 0x4 - core index']
  #allocation1 [shape = 'u32[72,128]{1,0:T(1,128)}', space=vmem, size = 0x9000, scoped, tag = 'internal scratch']
  %s0 = inlined_call_operand.vmem [shape: bf16[128,32], index: 0, kind: input, shape index: {}]
  %s1 = inlined_call_operand.vmem [shape: bf16[32,64], index: 1, kind: input, shape index: {}]
  %s2 = inlined_call_operand.vmem [shape: f32[1,64], index: 2, kind: input, shape index: {}]
  %s3 = inlined_call_operand.vmem [shape: f32[128,64], index: 3, kind: output, shape index: {}]
  %s4 = sld [smem:[#allocation0]]
  $region22: #{decoder_forward.3} parent=0
    _
  %s6 = ssub.s32 1, %s4
  %s7 = scalar_select 0, %s6, %s4
  // Predicated region
  $region2: #{decoder_forward.3} parent=0 // pred_check
    _
  $region3: #{decoder_forward.3} parent=0 // pred_check_branch
    %9 = sbr.rel (0) target = $region5
  $region4: #{decoder_forward.3} parent=0 // pred_region
    _
  $region5: #{decoder_forward.3} parent=0 // pred_fallthru
    _
  // Predicated region
  $region6: #{decoder_forward.3} parent=0 // pred_check
    _
  $region7: #{decoder_forward.3} parent=0 // pred_check_branch
    %11 = sbr.rel (0) target = $region9
  $region8: #{decoder_forward.3} parent=0 // pred_region
    _
  $region9: #{decoder_forward.3} parent=0 // pred_fallthru
    _
  // Predicated region
  $region10: #{decoder_forward.3} parent=0 // pred_check
    _
  $region11: #{decoder_forward.3} parent=0 // pred_check_branch
    %13 = sbr.rel (0) target = $region13
  $region12: #{decoder_forward.3} parent=0 // pred_region
    _
  $region13: #{decoder_forward.3} parent=0 // pred_fallthru
    _
  %v15 = vld [vmem:[%s0] sm:$0xf]
  %v16 = vld [vmem:[%s0 + $0x4] sm:$0xf]
  %v17 = vld [vmem:[%s0 + $0x8] sm:$0xf]
  %v18 = vld [vmem:[%s0 + $0xc] sm:$0xf]
  %v19 = vld [vmem:[%s0 + $0x10] sm:$0xf]
  %v20 = vld [vmem:[%s0 + $0x14] sm:$0xf]
  %v21 = vld [vmem:[%s0 + $0x18] sm:$0xf]
  %v22 = vld [vmem:[%s0 + $0x1c] sm:$0xf]
  %v23 = vld [vmem:[%s0 + $0x20] sm:$0xf]
  %v24 = vld [vmem:[%s0 + $0x24] sm:$0xf]
  %v25 = vld [vmem:[%s0 + $0x28] sm:$0xf]
  %v26 = vld [vmem:[%s0 + $0x2c] sm:$0xf]
  %v27 = vld [vmem:[%s0 + $0x30] sm:$0xf]
  %v28 = vld [vmem:[%s0 + $0x34] sm:$0xf]
  %v29 = vld [vmem:[%s0 + $0x38] sm:$0xf]
  %v30 = vld [vmem:[%s0 + $0x3c] sm:$0xf]
  %v31 = vld [vmem:[%s1] sm:$0xf]
  %v32 = vld [vmem:[%s1 + $0x4] sm:$0xf]
  %v33 = vld [vmem:[%s1 + $0x8] sm:$0xf]
  %v34 = vld [vmem:[%s1 + $0xc] sm:$0xf]
  %v35 = vld [vmem:[%s2] sm:$0x1]
  %v37 = vperm.slane %v35, 0
  %v55 = vunpack.c.l.b16 %v15
  %v56 = vunpack.c.l.b16 %v16
  %v57 = vunpack.c.l.b16 %v17
  %v58 = vunpack.c.l.b16 %v18
  %v59 = vunpack.c.l.b16 %v19
  %v60 = vunpack.c.l.b16 %v20
  %v61 = vunpack.c.l.b16 %v21
  %v62 = vunpack.c.l.b16 %v22
  %v63 = vunpack.c.l.b16 %v23
  %v64 = vunpack.c.l.b16 %v24
  %v65 = vunpack.c.l.b16 %v25
  %v66 = vunpack.c.l.b16 %v26
  %v67 = vunpack.c.l.b16 %v27
  %v68 = vunpack.c.l.b16 %v28
  %v69 = vunpack.c.l.b16 %v29
  %v70 = vunpack.c.l.b16 %v30
  %v71 = vpack.c.b16 %v56, %v55
  %v72 = vpack.c.b16 %v58, %v57
  %v73 = vpack.c.b16 %v60, %v59
  %v74 = vpack.c.b16 %v62, %v61
  %v75 = vpack.c.b16 %v64, %v63
  %v76 = vpack.c.b16 %v66, %v65
  %v77 = vpack.c.b16 %v68, %v67
  %v78 = vpack.c.b16 %v70, %v69
  %v83 = vunpack.c.l.b16 %v31
  %v84 = vunpack.c.l.b16 %v32
  %v85 = vunpack.c.l.b16 %v33
  %v86 = vunpack.c.l.b16 %v34
  %v87 = vpack.c.b16 %v84, %v83
  %v88 = vpack.c.b16 %v86, %v85
  %vm91 = vcmask 261120
  %v93 = vsel %vm91, %v71, 0
  %v96 = vsel %vm91, %v72, 0
  %v99 = vsel %vm91, %v73, 0
  %v102 = vsel %vm91, %v74, 0
  %v105 = vsel %vm91, %v75, 0
  %v108 = vsel %vm91, %v76, 0
  %v111 = vsel %vm91, %v77, 0
  %v114 = vsel %vm91, %v78, 0
  %116 = vmatpush.bf16.msra.mxu0 0
  %117 = vmatpush.bf16.msra.mxu0 0
  %118 = vmatpush.bf16.msra.mxu0 0
  %119 = vmatpush.bf16.msra.mxu0 0
  %120 = vmatpush.bf16.msra.mxu0 0
  %121 = vmatpush.bf16.msra.mxu0 0
  %122 = vmatpush.bf16.msra.mxu0 %v88
  %123 = vmatpush.bf16.msra.mxu0 %v87
  %124 = vmatmul.bf16.gmra.mxu0 %v93
  %v125 = vpop.f32.mrf.mxu0
  %v126 = vadd.f32 %v37, %v125
  %v127 = vpop.f32.mrf.mxu0
  %v128 = vadd.f32 %v37, %v127
  %129 = vmatmul.bf16.gmra.mxu0 %v96
  %v130 = vpop.f32.mrf.mxu0
  %v131 = vadd.f32 %v37, %v130
  %v132 = vpop.f32.mrf.mxu0
  %v133 = vadd.f32 %v37, %v132
  %134 = vmatmul.bf16.gmra.mxu0 %v99
  %v135 = vpop.f32.mrf.mxu0
  %v136 = vadd.f32 %v37, %v135
  %v137 = vpop.f32.mrf.mxu0
  %v138 = vadd.f32 %v37, %v137
  %139 = vmatmul.bf16.gmra.mxu0 %v102
  %v140 = vpop.f32.mrf.mxu0
  %v141 = vadd.f32 %v37, %v140
  %v142 = vpop.f32.mrf.mxu0
  %v143 = vadd.f32 %v37, %v142
  %144 = vmatmul.bf16.gmra.mxu0 %v105
  %v145 = vpop.f32.mrf.mxu0
  %v146 = vadd.f32 %v37, %v145
  %v147 = vpop.f32.mrf.mxu0
  %v148 = vadd.f32 %v37, %v147
  %149 = vmatmul.bf16.gmra.mxu0 %v108
  %v150 = vpop.f32.mrf.mxu0
  %v151 = vadd.f32 %v37, %v150
  %v152 = vpop.f32.mrf.mxu0
  %v153 = vadd.f32 %v37, %v152
  %154 = vmatmul.bf16.gmra.mxu0 %v111
  %v155 = vpop.f32.mrf.mxu0
  %v156 = vadd.f32 %v37, %v155
  %v157 = vpop.f32.mrf.mxu0
  %v158 = vadd.f32 %v37, %v157
  %159 = vmatmul.bf16.gmra.mxu0 %v114
  %v160 = vpop.f32.mrf.mxu0
  %v161 = vadd.f32 %v37, %v160
  %v162 = vpop.f32.mrf.mxu0
  %v163 = vadd.f32 %v37, %v162
  %164 = vdwg.mxu0
  %vm165 = vcmask 523264
  %166 = vst.msk [vmem:[%s3] sm:$0xff] %vm165, %v126
  %167 = vst.msk [vmem:[%s3 + $0x8] sm:$0xff] %vm165, %v128
  %168 = vst.msk [vmem:[%s3 + $0x10] sm:$0xff] %vm165, %v131
  %169 = vst.msk [vmem:[%s3 + $0x18] sm:$0xff] %vm165, %v133
  %170 = vst.msk [vmem:[%s3 + $0x20] sm:$0xff] %vm165, %v136
  %171 = vst.msk [vmem:[%s3 + $0x28] sm:$0xff] %vm165, %v138
  %172 = vst.msk [vmem:[%s3 + $0x30] sm:$0xff] %vm165, %v141
  %173 = vst.msk [vmem:[%s3 + $0x38] sm:$0xff] %vm165, %v143
  %174 = vst.msk [vmem:[%s3 + $0x40] sm:$0xff] %vm165, %v146
  %175 = vst.msk [vmem:[%s3 + $0x48] sm:$0xff] %vm165, %v148
  %176 = vst.msk [vmem:[%s3 + $0x50] sm:$0xff] %vm165, %v151
  %177 = vst.msk [vmem:[%s3 + $0x58] sm:$0xff] %vm165, %v153
  %178 = vst.msk [vmem:[%s3 + $0x60] sm:$0xff] %vm165, %v156
  %179 = vst.msk [vmem:[%s3 + $0x68] sm:$0xff] %vm165, %v158
  %180 = vst.msk [vmem:[%s3 + $0x70] sm:$0xff] %vm165, %v161
  %181 = vst.msk [vmem:[%s3 + $0x78] sm:$0xff] %vm165, %v163
  // Predicated region
  $region14: #{decoder_forward.3} parent=0 // pred_check
    _
  $region15: #{decoder_forward.3} parent=0 // pred_check_branch
    %183 = sbr.rel (0) target = $region17
  $region16: #{decoder_forward.3} parent=0 // pred_region
    _
  $region17: #{decoder_forward.3} parent=0 // pred_fallthru
    _
  // Predicated region
  $region18: #{decoder_forward.3} parent=0 // pred_check
    _
  $region19: #{decoder_forward.3} parent=0 // pred_check_branch
    %185 = sbr.rel (0) target = $region21
  $region20: #{decoder_forward.3} parent=0 // pred_region
    _
  $region21: #{decoder_forward.3} parent=0 // pred_fallthru
    _

// kernel: decoder_forward.2
$region0: #{decoder_forward.2}
  #allocation0 [shape = 'u32[]', space=smem, size = 0x4, offset = 0x4, fixed_abs, tag = 'smem constant byte address 0x4 - core index']
  #allocation1 [shape = 'u32[72,128]{1,0:T(1,128)}', space=vmem, size = 0x9000, scoped, tag = 'internal scratch']
  #allocation2 [shape = 'f32[2,32]{1,0:T(2,128)}', space=vmem, size = 0x400, scoped, tag = 'scratch operand']
  #allocation3 [shape = 'f32[2,32]{1,0:T(2,128)}', space=vmem, size = 0x400, scoped, tag = 'scratch operand']
  #allocation4 [shape = 'f32[1,1]{1,0:T(1,128)S(1)}', space=vmem, size = 0x200, scoped, tag = 'scoped memory for decoder_forward.2']
  %s0 = inlined_call_operand.vmem [shape: bf16[2,16,32], index: 0, kind: input, shape index: {}]
  %s1 = inlined_call_operand.vmem [shape: bf16[2,16,32], index: 1, kind: input, shape index: {}]
  %s2 = inlined_call_operand.vmem [shape: f32[2,32], index: 2, kind: input, shape index: {}]
  %s3 = inlined_call_operand.vmem [shape: f32[2,32], index: 3, kind: input, shape index: {}]
  %s4 = inlined_call_operand.vmem [shape: f32[8,2,128], index: 4, kind: input, shape index: {}]
  %s5 = inlined_call_operand.vmem [shape: bf16[32,192], index: 5, kind: input, shape index: {}]
  %s6 = inlined_call_operand.vmem [shape: f32[1,192], index: 6, kind: input, shape index: {}]
  %s7 = inlined_call_operand.vmem [shape: bf16[32,128], index: 7, kind: input, shape index: {}]
  %s8 = inlined_call_operand.vmem [shape: f32[1,32], index: 8, kind: input, shape index: {}]
  %s9 = inlined_call_operand.<no memory space> [shape: f32[1,1], index: 9, kind: input, shape index: {}]
  %s10 = inlined_call_operand.vmem [shape: bf16[8,2,32], index: 10, kind: output, shape index: {0}]
  %s11 = inlined_call_operand.vmem [shape: f32[8,2,16], index: 11, kind: output, shape index: {1}]
  %12 = xla_tuple %s10, %s11
  %s13 = sld [smem:[#allocation0]]
  $region85: #{decoder_forward.2} parent=0
    _
  %s15 = ssub.s32 1, %s13
  %s16 = scalar_select 0, %s15, %s13
  %v17 = vstv %s9
  %18 = vst [vmem:[#allocation4] sm:$0x1] %v17
  loop: start=0, step=1, limit=10
  $region2: #{decoder_forward.2} parent=0 // loop_pre_header
    _
  $region3: #{decoder_forward.2} parent=0 // loop_header
    %s20 = sphi 0, %s24
    %p21 = scmp.ge.s32.totalorder %s20, 10
    %s27 = sphi 0, %s39
    %s28 = sphi 0, %s35
    %s29 = sphi 0, %s27
    %s30 = sphi 0, %s28
    %s31 = sphi 0, %s29
    %s32 = sphi 0, %s30
    %s42 = sphi 0, %s44
    %s45 = sphi 0, %s42
    %s46 = sphi 0, %s45
    %s62 = sphi 0, %s46
    %s68 = sphi 0, %s70
    %s71 = sphi 0, %s68
    %s72 = sphi 0, %s71
    %s88 = sphi 0, %s72
    %s94 = sphi 0, %s96
    %s97 = sphi 0, %s94
    %s98 = sphi 0, %s97
    %s114 = sphi 0, %s98
    %s120 = sphi 0, %s122
    %s123 = sphi 0, %s120
    %s124 = sphi 0, %s123
    %s140 = sphi 0, %s124
    %s148 = sphi 0, %s150
    %s151 = sphi 0, %s148
    %s152 = sphi 0, %s151
    %s168 = sphi 0, %s152
    %s172 = sphi 0, %s172
    %s174 = sphi 0, %s172
    %s175 = sphi 0, %s174
    %s189 = sphi 0, %s175
    %s193 = sphi 0, %s193
    %s195 = sphi 0, %s193
    %s196 = sphi 0, %s195
    %s210 = sphi 0, %s196
    %s214 = sphi 0, %s214
    %s216 = sphi 0, %s214
    %s217 = sphi 0, %s216
    %s231 = sphi 0, %s217
    %s235 = sphi 0, %s235
    %s237 = sphi 0, %s235
    %s238 = sphi 0, %s237
    %s252 = sphi 0, %s238
    %s256 = sphi 0, %s256
    %s258 = sphi 0, %s256
    %s259 = sphi 0, %s258
    %s273 = sphi 0, %s259
    %s281 = sphi 0, %s283
    %s284 = sphi 0, %s281
    %s285 = sphi 0, %s284
    %s301 = sphi 0, %s285
    %s309 = sphi 0, %s311
    %s312 = sphi 0, %s309
    %s313 = sphi 0, %s312
    %s329 = sphi 0, %s313
  $region4: #{decoder_forward.2} parent=0 // loop_header_branch
    %23 = sbr.rel (%p21) target = $region8
  $region5: #{decoder_forward.2} parent=0 // loop_body
    %s25 = ssub.s32 %s20, 1
    %s26 = ssub.s32 %s20, 2
    %s33 = sadd.s32 1, %s28
    %p34 = scmp.ge.s32.totalorder %s33, 8
    %s35 = scalar_select %p34, 0, %s33
    %s36 = sadd.s32 1, %s27
    %s37 = scalar_select %p34, %s36, %s27
    %p38 = scmp.ge.s32.totalorder %s37, 1
    %s39 = scalar_select %p38, 0, %s37
    %s40 = ssub.s32 %s27, %s39
    %p41 = scmp.eq.s32.totalorder %s40, 0
    %s43 = sadd.s32 %s42, 1
    %s44 = scalar_select %p41, %s42, %s43
    %p47 = pneg %p41
    %p48 = scmp.eq.s32.totalorder %s20, 7
    %p49 = por %p47, %p48
    %p50 = scmp.ne.s32.totalorder %s42, %s45
    %p51 = scmp.eq.s32.totalorder %s20, 0
    %p52 = por %p50, %p51
    %p53 = scmp.ne.s32.totalorder %s42, %s45
    %p54 = scmp.eq.s32.totalorder %s25, 7
    %p55 = por %p53, %p54
    %p56 = scmp.ne.s32.totalorder %s45, %s46
    %p57 = scmp.eq.s32.totalorder %s25, 0
    %p58 = por %p56, %p57
    %p59 = scmp.ne.s32.totalorder %s45, %s46
    %p60 = scmp.eq.s32.totalorder %s26, 7
    %p61 = por %p59, %p60
    %p63 = scmp.ne.s32.totalorder %s46, %s62
    %p64 = scmp.eq.s32.totalorder %s26, 0
    %p65 = por %p63, %p64
    %s66 = ssub.s32 %s27, %s39
    %p67 = scmp.eq.s32.totalorder %s66, 0
    %s69 = sadd.s32 %s68, 1
    %s70 = scalar_select %p67, %s68, %s69
    %p73 = pneg %p67
    %p74 = scmp.eq.s32.totalorder %s20, 7
    %p75 = por %p73, %p74
    %p76 = scmp.ne.s32.totalorder %s68, %s71
    %p77 = scmp.eq.s32.totalorder %s20, 0
    %p78 = por %p76, %p77
    %p79 = scmp.ne.s32.totalorder %s68, %s71
    %p80 = scmp.eq.s32.totalorder %s25, 7
    %p81 = por %p79, %p80
    %p82 = scmp.ne.s32.totalorder %s71, %s72
    %p83 = scmp.eq.s32.totalorder %s25, 0
    %p84 = por %p82, %p83
    %p85 = scmp.ne.s32.totalorder %s71, %s72
    %p86 = scmp.eq.s32.totalorder %s26, 7
    %p87 = por %p85, %p86
    %p89 = scmp.ne.s32.totalorder %s72, %s88
    %p90 = scmp.eq.s32.totalorder %s26, 0
    %p91 = por %p89, %p90
    %s92 = ssub.s32 %s27, %s39
    %p93 = scmp.eq.s32.totalorder %s92, 0
    %s95 = sadd.s32 %s94, 1
    %s96 = scalar_select %p93, %s94, %s95
    %p99 = pneg %p93
    %p100 = scmp.eq.s32.totalorder %s20, 7
    %p101 = por %p99, %p100
    %p102 = scmp.ne.s32.totalorder %s94, %s97
    %p103 = scmp.eq.s32.totalorder %s20, 0
    %p104 = por %p102, %p103
    %p105 = scmp.ne.s32.totalorder %s94, %s97
    %p106 = scmp.eq.s32.totalorder %s25, 7
    %p107 = por %p105, %p106
    %p108 = scmp.ne.s32.totalorder %s97, %s98
    %p109 = scmp.eq.s32.totalorder %s25, 0
    %p110 = por %p108, %p109
    %p111 = scmp.ne.s32.totalorder %s97, %s98
    %p112 = scmp.eq.s32.totalorder %s26, 7
    %p113 = por %p111, %p112
    %p115 = scmp.ne.s32.totalorder %s98, %s114
    %p116 = scmp.eq.s32.totalorder %s26, 0
    %p117 = por %p115, %p116
    %s118 = ssub.s32 %s27, %s39
    %p119 = scmp.eq.s32.totalorder %s118, 0
    %s121 = sadd.s32 %s120, 1
    %s122 = scalar_select %p119, %s120, %s121
    %p125 = pneg %p119
    %p126 = scmp.eq.s32.totalorder %s20, 7
    %p127 = por %p125, %p126
    %p128 = scmp.ne.s32.totalorder %s120, %s123
    %p129 = scmp.eq.s32.totalorder %s20, 0
    %p130 = por %p128, %p129
    %p131 = scmp.ne.s32.totalorder %s120, %s123
    %p132 = scmp.eq.s32.totalorder %s25, 7
    %p133 = por %p131, %p132
    %p134 = scmp.ne.s32.totalorder %s123, %s124
    %p135 = scmp.eq.s32.totalorder %s25, 0
    %p136 = por %p134, %p135
    %p137 = scmp.ne.s32.totalorder %s123, %s124
    %p138 = scmp.eq.s32.totalorder %s26, 7
    %p139 = por %p137, %p138
    %p141 = scmp.ne.s32.totalorder %s124, %s140
    %p142 = scmp.eq.s32.totalorder %s26, 0
    %p143 = por %p141, %p142
    %s144 = ssub.s32 %s28, %s35
    %s145 = ssub.s32 %s27, %s39
    %s146 = sor.u32 %s144, %s145
    %p147 = scmp.eq.s32.totalorder %s146, 0
    %s149 = sadd.s32 %s148, 1
    %s150 = scalar_select %p147, %s148, %s149
    %p153 = pneg %p147
    %p154 = scmp.eq.s32.totalorder %s20, 7
    %p155 = por %p153, %p154
    %p156 = scmp.ne.s32.totalorder %s148, %s151
    %p157 = scmp.eq.s32.totalorder %s20, 0
    %p158 = por %p156, %p157
    %p159 = scmp.ne.s32.totalorder %s148, %s151
    %p160 = scmp.eq.s32.totalorder %s25, 7
    %p161 = por %p159, %p160
    %p162 = scmp.ne.s32.totalorder %s151, %s152
    %p163 = scmp.eq.s32.totalorder %s25, 0
    %p164 = por %p162, %p163
    %p165 = scmp.ne.s32.totalorder %s151, %s152
    %p166 = scmp.eq.s32.totalorder %s26, 7
    %p167 = por %p165, %p166
    %p169 = scmp.ne.s32.totalorder %s152, %s168
    %p170 = scmp.eq.s32.totalorder %s26, 0
    %p171 = por %p169, %p170
    %s173 = sadd.s32 %s172, 1
    %p176 = scmp.eq.s32.totalorder %s20, 7
    %p177 = scmp.ne.s32.totalorder %s172, %s174
    %p178 = scmp.eq.s32.totalorder %s20, 0
    %p179 = por %p177, %p178
    %p180 = scmp.ne.s32.totalorder %s172, %s174
    %p181 = scmp.eq.s32.totalorder %s25, 7
    %p182 = por %p180, %p181
    %p183 = scmp.ne.s32.totalorder %s174, %s175
    %p184 = scmp.eq.s32.totalorder %s25, 0
    %p185 = por %p183, %p184
    %p186 = scmp.ne.s32.totalorder %s174, %s175
    %p187 = scmp.eq.s32.totalorder %s26, 7
    %p188 = por %p186, %p187
    %p190 = scmp.ne.s32.totalorder %s175, %s189
    %p191 = scmp.eq.s32.totalorder %s26, 0
    %p192 = por %p190, %p191
    %s194 = sadd.s32 %s193, 1
    %p197 = scmp.eq.s32.totalorder %s20, 7
    %p198 = scmp.ne.s32.totalorder %s193, %s195
    %p199 = scmp.eq.s32.totalorder %s20, 0
    %p200 = por %p198, %p199
    %p201 = scmp.ne.s32.totalorder %s193, %s195
    %p202 = scmp.eq.s32.totalorder %s25, 7
    %p203 = por %p201, %p202
    %p204 = scmp.ne.s32.totalorder %s195, %s196
    %p205 = scmp.eq.s32.totalorder %s25, 0
    %p206 = por %p204, %p205
    %p207 = scmp.ne.s32.totalorder %s195, %s196
    %p208 = scmp.eq.s32.totalorder %s26, 7
    %p209 = por %p207, %p208
    %p211 = scmp.ne.s32.totalorder %s196, %s210
    %p212 = scmp.eq.s32.totalorder %s26, 0
    %p213 = por %p211, %p212
    %s215 = sadd.s32 %s214, 1
    %p218 = scmp.eq.s32.totalorder %s20, 7
    %p219 = scmp.ne.s32.totalorder %s214, %s216
    %p220 = scmp.eq.s32.totalorder %s20, 0
    %p221 = por %p219, %p220
    %p222 = scmp.ne.s32.totalorder %s214, %s216
    %p223 = scmp.eq.s32.totalorder %s25, 7
    %p224 = por %p222, %p223
    %p225 = scmp.ne.s32.totalorder %s216, %s217
    %p226 = scmp.eq.s32.totalorder %s25, 0
    %p227 = por %p225, %p226
    %p228 = scmp.ne.s32.totalorder %s216, %s217
    %p229 = scmp.eq.s32.totalorder %s26, 7
    %p230 = por %p228, %p229
    %p232 = scmp.ne.s32.totalorder %s217, %s231
    %p233 = scmp.eq.s32.totalorder %s26, 0
    %p234 = por %p232, %p233
    %s236 = sadd.s32 %s235, 1
    %p239 = scmp.eq.s32.totalorder %s20, 7
    %p240 = scmp.ne.s32.totalorder %s235, %s237
    %p241 = scmp.eq.s32.totalorder %s20, 0
    %p242 = por %p240, %p241
    %p243 = scmp.ne.s32.totalorder %s235, %s237
    %p244 = scmp.eq.s32.totalorder %s25, 7
    %p245 = por %p243, %p244
    %p246 = scmp.ne.s32.totalorder %s237, %s238
    %p247 = scmp.eq.s32.totalorder %s25, 0
    %p248 = por %p246, %p247
    %p249 = scmp.ne.s32.totalorder %s237, %s238
    %p250 = scmp.eq.s32.totalorder %s26, 7
    %p251 = por %p249, %p250
    %p253 = scmp.ne.s32.totalorder %s238, %s252
    %p254 = scmp.eq.s32.totalorder %s26, 0
    %p255 = por %p253, %p254
    %s257 = sadd.s32 %s256, 1
    %p260 = scmp.eq.s32.totalorder %s20, 7
    %p261 = scmp.ne.s32.totalorder %s256, %s258
    %p262 = scmp.eq.s32.totalorder %s20, 0
    %p263 = por %p261, %p262
    %p264 = scmp.ne.s32.totalorder %s256, %s258
    %p265 = scmp.eq.s32.totalorder %s25, 7
    %p266 = por %p264, %p265
    %p267 = scmp.ne.s32.totalorder %s258, %s259
    %p268 = scmp.eq.s32.totalorder %s25, 0
    %p269 = por %p267, %p268
    %p270 = scmp.ne.s32.totalorder %s258, %s259
    %p271 = scmp.eq.s32.totalorder %s26, 7
    %p272 = por %p270, %p271
    %p274 = scmp.ne.s32.totalorder %s259, %s273
    %p275 = scmp.eq.s32.totalorder %s26, 0
    %p276 = por %p274, %p275
    %s277 = ssub.s32 %s28, %s35
    %s278 = ssub.s32 %s27, %s39
    %s279 = sor.u32 %s277, %s278
    %p280 = scmp.eq.s32.totalorder %s279, 0
    %s282 = sadd.s32 %s281, 1
    %s283 = scalar_select %p280, %s281, %s282
    %p286 = pneg %p280
    %p287 = scmp.eq.s32.totalorder %s20, 7
    %p288 = por %p286, %p287
    %p289 = scmp.ne.s32.totalorder %s281, %s284
    %p290 = scmp.eq.s32.totalorder %s20, 0
    %p291 = por %p289, %p290
    %p292 = scmp.ne.s32.totalorder %s281, %s284
    %p293 = scmp.eq.s32.totalorder %s25, 7
    %p294 = por %p292, %p293
    %p295 = scmp.ne.s32.totalorder %s284, %s285
    %p296 = scmp.eq.s32.totalorder %s25, 0
    %p297 = por %p295, %p296
    %p298 = scmp.ne.s32.totalorder %s284, %s285
    %p299 = scmp.eq.s32.totalorder %s26, 7
    %p300 = por %p298, %p299
    %p302 = scmp.ne.s32.totalorder %s285, %s301
    %p303 = scmp.eq.s32.totalorder %s26, 0
    %p304 = por %p302, %p303
    %s305 = ssub.s32 %s28, %s35
    %s306 = ssub.s32 %s27, %s39
    %s307 = sor.u32 %s305, %s306
    %p308 = scmp.eq.s32.totalorder %s307, 0
    %s310 = sadd.s32 %s309, 1
    %s311 = scalar_select %p308, %s309, %s310
    %p314 = pneg %p308
    %p315 = scmp.eq.s32.totalorder %s20, 7
    %p316 = por %p314, %p315
    %p317 = scmp.ne.s32.totalorder %s309, %s312
    %p318 = scmp.eq.s32.totalorder %s20, 0
    %p319 = por %p317, %p318
    %p320 = scmp.ne.s32.totalorder %s309, %s312
    %p321 = scmp.eq.s32.totalorder %s25, 7
    %p322 = por %p320, %p321
    %p323 = scmp.ne.s32.totalorder %s312, %s313
    %p324 = scmp.eq.s32.totalorder %s25, 0
    %p325 = por %p323, %p324
    %p326 = scmp.ne.s32.totalorder %s312, %s313
    %p327 = scmp.eq.s32.totalorder %s26, 7
    %p328 = por %p326, %p327
    %p330 = scmp.ne.s32.totalorder %s313, %s329
    %p331 = scmp.eq.s32.totalorder %s26, 0
    %p332 = por %p330, %p331
    %p333 = scmp.le.s32.totalorder 1, %s20
    %p334 = scmp.lt.s32.totalorder %s20, 9
    %p335 = pnand %p333, %p334
    %p336 = pneg %p335
    // Predicated region
    $region9: #{decoder_forward.2} parent=5 // pred_check
      _
    $region10: #{decoder_forward.2} parent=5 // pred_check_branch
      %338 = sbr.rel (%p335) target = $region12
    $region11: #{decoder_forward.2} parent=5 // pred_region
      %s339 = ssub.s32 %s20, 1
      // Predicated region
      $region13: #{decoder_forward.2} parent=11 // pred_check
        %p340 = pneg %p58
      $region14: #{decoder_forward.2} parent=11 // pred_check_branch
        %342 = sbr.rel (%p340) target = $region16
      $region15: #{decoder_forward.2} parent=11 // pred_region
        %s343 = smul.u32 2, %s29
        %p344 = scmp.lt.s32.totalorder %s343, 1
        %s345 = scalar_select %p344, %s343, 1
        %s346 = smul.addr %s345, 2
        %s347 = smul.addr %s346, 4
        %s348 = scalar_lea.vmem %s0, %s347
        %s349 = smul.u32 2, %s29
      $region16: #{decoder_forward.2} parent=11 // pred_fallthru
        _
      // Predicated region
      $region17: #{decoder_forward.2} parent=11 // pred_check
        %p350 = pneg %p84
      $region18: #{decoder_forward.2} parent=11 // pred_check_branch
        %352 = sbr.rel (%p350) target = $region20
      $region19: #{decoder_forward.2} parent=11 // pred_region
        %s353 = smul.u32 2, %s29
        %p354 = scmp.lt.s32.totalorder %s353, 1
        %s355 = scalar_select %p354, %s353, 1
        %s356 = smul.addr %s355, 2
        %s357 = smul.addr %s356, 4
        %s358 = scalar_lea.vmem %s1, %s357
        %s359 = smul.u32 2, %s29
      $region20: #{decoder_forward.2} parent=11 // pred_fallthru
        _
      // Predicated region
      $region21: #{decoder_forward.2} parent=11 // pred_check
        %p360 = pneg %p110
      $region22: #{decoder_forward.2} parent=11 // pred_check_branch
        %362 = sbr.rel (%p360) target = $region24
      $region23: #{decoder_forward.2} parent=11 // pred_region
        %p363 = scmp.lt.s32.totalorder %s29, 0
        %s364 = scalar_select %p363, %s29, 0
        %s365 = smul.addr %s364, 2
        %s366 = scalar_lea.vmem %s2, %s365
      $region24: #{decoder_forward.2} parent=11 // pred_fallthru
        _
      // Predicated region
      $region25: #{decoder_forward.2} parent=11 // pred_check
        %p367 = pneg %p136
      $region26: #{decoder_forward.2} parent=11 // pred_check_branch
        %369 = sbr.rel (%p367) target = $region28
      $region27: #{decoder_forward.2} parent=11 // pred_region
        %p370 = scmp.lt.s32.totalorder %s29, 0
        %s371 = scalar_select %p370, %s29, 0
        %s372 = smul.addr %s371, 2
        %s373 = scalar_lea.vmem %s3, %s372
      $region28: #{decoder_forward.2} parent=11 // pred_fallthru
        _
      // Predicated region
      $region29: #{decoder_forward.2} parent=11 // pred_check
        %p374 = pneg %p185
      $region30: #{decoder_forward.2} parent=11 // pred_check_branch
        %376 = sbr.rel (%p374) target = $region32
      $region31: #{decoder_forward.2} parent=11 // pred_region
        _
      $region32: #{decoder_forward.2} parent=11 // pred_fallthru
        _
      // Predicated region
      $region33: #{decoder_forward.2} parent=11 // pred_check
        %p377 = pneg %p206
      $region34: #{decoder_forward.2} parent=11 // pred_check_branch
        %379 = sbr.rel (%p377) target = $region36
      $region35: #{decoder_forward.2} parent=11 // pred_region
        _
      $region36: #{decoder_forward.2} parent=11 // pred_fallthru
        _
      // Predicated region
      $region37: #{decoder_forward.2} parent=11 // pred_check
        %p380 = pneg %p227
      $region38: #{decoder_forward.2} parent=11 // pred_check_branch
        %382 = sbr.rel (%p380) target = $region40
      $region39: #{decoder_forward.2} parent=11 // pred_region
        _
      $region40: #{decoder_forward.2} parent=11 // pred_fallthru
        _
      // Predicated region
      $region41: #{decoder_forward.2} parent=11 // pred_check
        %p383 = pneg %p248
      $region42: #{decoder_forward.2} parent=11 // pred_check_branch
        %385 = sbr.rel (%p383) target = $region44
      $region43: #{decoder_forward.2} parent=11 // pred_region
        _
      $region44: #{decoder_forward.2} parent=11 // pred_fallthru
        _
      // Predicated region
      $region45: #{decoder_forward.2} parent=11 // pred_check
        %p386 = pneg %p269
      $region46: #{decoder_forward.2} parent=11 // pred_check_branch
        %388 = sbr.rel (%p386) target = $region48
      $region47: #{decoder_forward.2} parent=11 // pred_region
        _
      $region48: #{decoder_forward.2} parent=11 // pred_fallthru
        _
    $region12: #{decoder_forward.2} parent=5 // pred_fallthru
      _
    %p389 = scmp.lt.s32.totalorder %s20, 8
    // Predicated region
    $region49: #{decoder_forward.2} parent=5 // pred_check
      %p390 = pneg %p389
    $region50: #{decoder_forward.2} parent=5 // pred_check_branch
      %392 = sbr.rel (%p390) target = $region52
    $region51: #{decoder_forward.2} parent=5 // pred_region
      // Predicated region
      $region53: #{decoder_forward.2} parent=51 // pred_check
        %p393 = pneg %p158
      $region54: #{decoder_forward.2} parent=51 // pred_check_branch
        %395 = sbr.rel (%p393) target = $region56
      $region55: #{decoder_forward.2} parent=51 // pred_region
        %p396 = scmp.lt.s32.totalorder %s28, 7
        %s397 = scalar_select %p396, %s28, 7
        %p398 = scmp.lt.s32.totalorder %s27, 0
        %s399 = scalar_select %p398, %s27, 0
        %s400 = sadd.s32 %s399, %s397
        %s401 = smul.addr %s400, 2
        %s402 = scalar_lea.vmem %s4, %s401
      $region56: #{decoder_forward.2} parent=51 // pred_fallthru
        _
    $region52: #{decoder_forward.2} parent=5 // pred_fallthru
      _
    %p403 = scmp.le.s32.totalorder 1, %s20
    %p404 = scmp.lt.s32.totalorder %s20, 9
    %p405 = pnand %p403, %p404
    %p406 = pneg %p405
    // Predicated region
    $region57: #{decoder_forward.2} parent=5 // pred_check
      _
    $region58: #{decoder_forward.2} parent=5 // pred_check_branch
      %408 = sbr.rel (%p405) target = $region60
    $region59: #{decoder_forward.2} parent=5 // pred_region
      %s409 = ssub.s32 %s20, 1
      %s410 = smul.u32 2, %s29
      %p411 = scmp.lt.s32.totalorder %s410, 1
      %s412 = scalar_select %p411, %s410, 1
      %s413 = smul.addr %s412, 2
      %s414 = smul.addr %s413, 4
      %s415 = scalar_lea.vmem %s0, %s414
      %p416 = pneg %p58
      %p417 = pneg %p55
      %s418 = smul.u32 2, %s29
      %p419 = scmp.lt.s32.totalorder %s418, 1
      %s420 = scalar_select %p419, %s418, 1
      %s421 = smul.addr %s420, 2
      %s422 = smul.addr %s421, 4
      %s423 = scalar_lea.vmem %s1, %s422
      %p424 = pneg %p84
      %p425 = pneg %p81
      %p426 = scmp.lt.s32.totalorder %s29, 0
      %s427 = scalar_select %p426, %s29, 0
      %s428 = smul.addr %s427, 2
      %s429 = scalar_lea.vmem %s2, %s428
      %p430 = pneg %p110
      %p431 = pneg %p107
      %p432 = scmp.lt.s32.totalorder %s29, 0
      %s433 = scalar_select %p432, %s29, 0
      %s434 = smul.addr %s433, 2
      %s435 = scalar_lea.vmem %s3, %s434
      %p436 = pneg %p136
      %p437 = pneg %p133
      %p438 = scmp.lt.s32.totalorder %s30, 7
      %s439 = scalar_select %p438, %s30, 7
      %p440 = scmp.lt.s32.totalorder %s29, 0
      %s441 = scalar_select %p440, %s29, 0
      %s442 = sadd.s32 %s441, %s439
      %s443 = smul.addr %s442, 2
      %s444 = scalar_lea.vmem %s4, %s443
      %p445 = pneg %p164
      %p446 = pneg %p161
      %p447 = pneg %p185
      %p448 = pneg %p182
      %p449 = pneg %p206
      %p450 = pneg %p203
      %p451 = pneg %p227
      %p452 = pneg %p224
      %p453 = pneg %p248
      %p454 = pneg %p245
      %p455 = pneg %p269
      %p456 = pneg %p266
      %p457 = pneg %p297
      %p458 = pneg %p294
      %p459 = scmp.lt.s32.totalorder %s30, 7
      %s460 = scalar_select %p459, %s30, 7
      %p461 = scmp.lt.s32.totalorder %s29, 0
      %s462 = scalar_select %p461, %s29, 0
      %s463 = sadd.s32 %s462, %s460
      %s464 = scalar_lea.vmem %s10, %s463
      %p465 = pneg %p325
      %p466 = pneg %p322
      %p467 = scmp.lt.s32.totalorder %s30, 7
      %s468 = scalar_select %p467, %s30, 7
      %p469 = scmp.lt.s32.totalorder %s29, 0
      %s470 = scalar_select %p469, %s29, 0
      %s471 = sadd.s32 %s470, %s468
      %s472 = smul.addr %s471, 2
      %s473 = scalar_lea.vmem %s11, %s472
      %s474 = smul.u32 2, %s29
      %p475 = scmp.lt.s32.totalorder %s474, 1
      %s476 = scalar_select %p475, %s474, 1
      %s477 = smul.addr %s476, 2
      %s478 = smul.addr %s477, 4
      %s479 = scalar_lea.vmem %s0, %s478
      %s480 = smul.u32 2, %s29
      %s481 = smul.u32 2, %s29
      %p482 = scmp.lt.s32.totalorder %s481, 1
      %s483 = scalar_select %p482, %s481, 1
      %s484 = smul.addr %s483, 2
      %s485 = smul.addr %s484, 4
      %s486 = scalar_lea.vmem %s1, %s485
      %s487 = smul.u32 2, %s29
      %p488 = scmp.lt.s32.totalorder %s29, 0
      %s489 = scalar_select %p488, %s29, 0
      %s490 = smul.addr %s489, 2
      %s491 = scalar_lea.vmem %s2, %s490
      %p492 = scmp.lt.s32.totalorder %s29, 0
      %s493 = scalar_select %p492, %s29, 0
      %s494 = smul.addr %s493, 2
      %s495 = scalar_lea.vmem %s3, %s494
      %p496 = scmp.lt.s32.totalorder %s30, 7
      %s497 = scalar_select %p496, %s30, 7
      %p498 = scmp.lt.s32.totalorder %s29, 0
      %s499 = scalar_select %p498, %s29, 0
      %s500 = sadd.s32 %s499, %s497
      %s501 = smul.addr %s500, 2
      %s502 = scalar_lea.vmem %s4, %s501
      %p503 = scmp.lt.s32.totalorder %s30, 7
      %s504 = scalar_select %p503, %s30, 7
      %p505 = scmp.lt.s32.totalorder %s29, 0
      %s506 = scalar_select %p505, %s29, 0
      %s507 = sadd.s32 %s506, %s504
      %s508 = scalar_lea.vmem %s10, %s507
      %p509 = scmp.lt.s32.totalorder %s30, 7
      %s510 = scalar_select %p509, %s30, 7
      %p511 = scmp.lt.s32.totalorder %s29, 0
      %s512 = scalar_select %p511, %s29, 0
      %s513 = sadd.s32 %s512, %s510
      %s514 = smul.addr %s513, 2
      %s515 = scalar_lea.vmem %s11, %s514
      %p517 = scmp.eq.s32.totalorder %s30, 0
      // Predicated region
      $region61: #{decoder_forward.2} parent=59 // pred_check
        %p518 = pneg %p517
      $region62: #{decoder_forward.2} parent=59 // pred_check_branch
        %520 = sbr.rel (%p518) target = $region64
      $region63: #{decoder_forward.2} parent=59 // pred_region
        %v521 = vld [vmem:[%s491] sm:$0x3]
        %vm522 = vcmask 254976
        %523 = vst.msk [vmem:[#allocation2] sm:$0x3] %vm522, %v521
        %v524 = vld [vmem:[%s495] sm:$0x3]
        %525 = vst.msk [vmem:[#allocation3] sm:$0x3] %vm522, %v524
      $region64: #{decoder_forward.2} parent=59 // pred_fallthru
        _
      %v526 = vld [vmem:[#allocation2] sm:$0x3]
      %v527 = vld [vmem:[#allocation3] sm:$0x3]
      %v528 = vpack.c.bf16 %v526, %v526
      %v529 = vld [vmem:[%s5] sm:$0xff]
      %v530 = vld [vmem:[%s5 + $0x8] sm:$0xff]
      %v531 = vld [vmem:[%s5 + $0x10] sm:$0xff]
      %v532 = vld [vmem:[%s5 + $0x18] sm:$0xff]
      %v533 = vld [vmem:[%s6] sm:$0x3]
      %v535 = vperm.slane %v533, 0
      %v536 = vperm.slane %v533, 1
      %v543 = vunpack.c.l.b16 %v529
      %v544 = vunpack.c.h.b16 %v529
      %v545 = vunpack.c.l.b16 %v530
      %v546 = vunpack.c.h.b16 %v530
      %v547 = vunpack.c.l.b16 %v531
      %v548 = vunpack.c.h.b16 %v531
      %v549 = vunpack.c.l.b16 %v532
      %v550 = vunpack.c.h.b16 %v532
      %v551 = vpack.c.b16 %v545, %v543
      %v552 = vpack.c.b16 %v546, %v544
      %v553 = vpack.c.b16 %v549, %v547
      %v554 = vpack.c.b16 %v550, %v548
      %vm559 = vcmask 261120
      %v561 = vsel %vm559, %v528, 0
      %563 = vmatpush.bf16.msra.mxu0 0
      %564 = vmatpush.bf16.msra.mxu0 0
      %565 = vmatpush.bf16.msra.mxu0 0
      %566 = vmatpush.bf16.msra.mxu0 0
      %567 = vmatpush.bf16.msra.mxu0 0
      %568 = vmatpush.bf16.msra.mxu0 0
      %569 = vmatpush.bf16.msra.mxu0 %v553
      %570 = vmatpush.bf16.msra.mxu0 %v551
      %571 = vmatmul.bf16.gmra.mxu0 %v561
      %v572 = vpop.f32.mrf.mxu0
      %v573 = vadd.f32 %v535, %v572
      %v574 = vpop.f32.mrf.mxu0
      %575 = vdwg.mxu0
      %576 = vmatpush.bf16.msra.mxu0 0
      %577 = vmatpush.bf16.msra.mxu0 0
      %578 = vmatpush.bf16.msra.mxu0 0
      %579 = vmatpush.bf16.msra.mxu0 0
      %580 = vmatpush.bf16.msra.mxu0 0
      %581 = vmatpush.bf16.msra.mxu0 0
      %582 = vmatpush.bf16.msra.mxu0 %v554
      %583 = vmatpush.bf16.msra.mxu0 %v552
      %584 = vmatmul.bf16.gmra.mxu0 %v561
      %v585 = vpop.f32.mrf.mxu0
      %v586 = vadd.f32 %v536, %v585
      %v587 = vpop.f32.mrf.mxu0
      %588 = vdwg.mxu0
      %v589 = vld [vmem:[%s486] sm:$0xf]
      %v590 = vld [vmem:[%s486 + $0x4] sm:$0xf]
      %v591 = vld [vmem:[%s486 + $0x8] sm:$0xf]
      %v592 = vld [vmem:[%s486 + $0xc] sm:$0xf]
      %v593 = vunpack.c.l.bf16 %v589
      %v594 = vunpack.c.l.bf16 %v590
      %v595 = vunpack.c.l.bf16 %v591
      %v596 = vunpack.c.l.bf16 %v592
      %v598 = vrot.slane %v573, 1
      %v599 = vperm.slane %v573, 0
      %v600 = vperm.slane %v598, 0
      %v603 = vadd.f32 %v593, %v599
      %v604 = vadd.f32 %v594, %v599
      %v605 = vadd.f32 %v595, %v600
      %v606 = vadd.f32 %v596, %v600
      %v607 = vmax.f32 %v603, 0.0
      %v608 = vmax.f32 %v604, 0.0
      %v609 = vmax.f32 %v605, 0.0
      %v610 = vmax.f32 %v606, 0.0
      %v611 = vld [vmem:[%s8] sm:$0x1]
      %v613 = vperm.slane %v611, 0
      %v615 = vmul.f32 %v607, %v613
      %v616 = vmul.f32 %v608, %v613
      %v617 = vmul.f32 %v609, %v613
      %v618 = vmul.f32 %v610, %v613
      %v619 = vsel %vm559, %v615, 0.0
      %620 = vadd.xlane.f32.xlu0 %v619
      %v621 = vpop.xlane.xlu0 %620
      %v622 = vsel %vm559, %v616, 0.0
      %623 = vadd.xlane.f32.xlu0 %v622
      %v624 = vpop.xlane.xlu0 %623
      %v625 = vsel %vm559, %v617, 0.0
      %626 = vadd.xlane.f32.xlu0 %v625
      %v627 = vpop.xlane.xlu0 %626
      %v628 = vsel %vm559, %v618, 0.0
      %629 = vadd.xlane.f32.xlu0 %v628
      %v630 = vpop.xlane.xlu0 %629
      %v631 = vld [vmem:[#allocation4] sm:$0x1]
      %v633 = vperm.slane %v631, 0
      %634 = vset.pattern.permute.xlu0 0
      %635 = vperm.xlu0 %634, %v633
      %v636 = vpop.permute.xlu0 %635
      %v638 = vadd.f32 %v621, %v636
      %v639 = vadd.f32 %v624, %v636
      %v640 = vadd.f32 %v627, %v636
      %v641 = vadd.f32 %v630, %v636
      %v646 = vlaneseq
      %v647 = vand.u32 %v646, 127
      %v648 = vperm.slane %v638, %v647
      %v649 = vadd.s32 %v647, 4294967288
      %v650 = vperm.slane %v639, %v649
      %vm651 = vcmask 130112
      %v652 = vsel %vm651, %v650, %v648
      %v653 = vperm.slane %v640, %v647
      %v654 = vperm.slane %v641, %v649
      %v655 = vsel %vm651, %v654, %v653
      %vm656 = vcmask 1041409
      %v657 = vsel %vm656, %v655, %v652
      %vm659 = vcmask 123904
      %v660 = vsel %vm659, %v657, -inf
      %661 = vmax.xlane.f32.xlu0 %v660
      %v662 = vpop.xlane.xlu0 %661
      %v664 = vperm.slane %v662, 0
      %v665 = vperm.slane %v662, 1
      %v668 = vsub.f32 %v638, %v664
      %v669 = vsub.f32 %v639, %v664
      %v670 = vsub.f32 %v640, %v665
      %v671 = vsub.f32 %v641, %v665
      %v672 = vmul.f32 %v668, 1.442695
      %v673 = vpow.pop %v672
      %v674 = vmul.f32 %v669, 1.442695
      %v675 = vpow.pop %v674
      %v676 = vmul.f32 %v670, 1.442695
      %v677 = vpow.pop %v676
      %v678 = vmul.f32 %v671, 1.442695
      %v679 = vpow.pop %v678
      %684 = vset.pattern.permute.xlu0 0
      %685 = vperm.xlu0 %684, %v673
      %v686 = vpop.permute.xlu0 %685
      %687 = vset.pattern.permute.xlu0 0
      %688 = vperm.xlu0 %687, %v675
      %v689 = vpop.permute.xlu0 %688
      %690 = vset.pattern.permute.xlu0 0
      %691 = vperm.xlu0 %690, %v677
      %v692 = vpop.permute.xlu0 %691
      %693 = vset.pattern.permute.xlu0 0
      %694 = vperm.xlu0 %693, %v679
      %v695 = vpop.permute.xlu0 %694
      %v696 = vperm.slane %v686, %v647
      %v697 = vperm.slane %v689, %v649
      %v698 = vsel %vm651, %v697, %v696
      %v699 = vperm.slane %v692, %v647
      %v700 = vperm.slane %v695, %v649
      %v701 = vsel %vm651, %v700, %v699
      %v702 = vsel %vm656, %v701, %v698
      %v704 = vsel %vm659, %v702, 0.0
      %705 = vadd.xlane.f32.xlu0 %v704
      %v706 = vpop.xlane.xlu0 %705
      %v707 = vrcp.pop %v706
      %v708 = vmul.f32 %v706, %v707
      %v709 = vsub.f32 1.0, %v708
      %v710 = vmul.f32 %v707, %v709
      %v711 = vadd.f32 %v707, %v710
      %vm712 = vweird.f32 %v706
      %vm713 = vweird.f32 %v707
      %vm714 = vmor %vm712, %vm713
      %v715 = vsel %vm714, %v707, %v711
      %v716 = vand.u32 2147483647, %v706
      %vm717 = vcmp.eq.f32.partialorder %v716, 8.507059e+37
      %v718 = vand.u32 %v706, 2147483648
      %v719 = vor.u32 1.1754944e-38, %v718
      %v720 = vsel %vm717, %v719, %v715
      %v722 = vperm.slane %v720, 0
      %v723 = vperm.slane %v720, 1
      %v726 = vmul.f32 %v673, %v722
      %v727 = vmul.f32 %v675, %v722
      %v728 = vmul.f32 %v677, %v723
      %v729 = vmul.f32 %v679, %v723
      %v730 = vld [vmem:[%s479] sm:$0xf]
      %v731 = vld [vmem:[%s479 + $0x4] sm:$0xf]
      %v732 = vld [vmem:[%s479 + $0x8] sm:$0xf]
      %v733 = vld [vmem:[%s479 + $0xc] sm:$0xf]
      %v734 = vunpack.c.l.bf16 %v730
      %v735 = vunpack.c.l.bf16 %v731
      %v736 = vunpack.c.l.bf16 %v732
      %v737 = vunpack.c.l.bf16 %v733
      %739 = vset.pattern.permute.xlu0 0
      %740 = vperm.xlu0 %739, %v726
      %v741 = vpop.permute.xlu0 %740
      %744 = vset.pattern.permute.xlu0 0
      %745 = vperm.xlu0 %744, %v727
      %v746 = vpop.permute.xlu0 %745
      %749 = vset.pattern.permute.xlu0 0
      %750 = vperm.xlu0 %749, %v728
      %v751 = vpop.permute.xlu0 %750
      %754 = vset.pattern.permute.xlu0 0
      %755 = vperm.xlu0 %754, %v729
      %v756 = vpop.permute.xlu0 %755
      %v758 = vmul.f32 %v734, %v741
      %v759 = vmul.f32 %v735, %v746
      %v760 = vmul.f32 %v736, %v751
      %v761 = vmul.f32 %v737, %v756
      %v762 = vsel %vm559, %v758, 0.0
      %v763 = vsel %vm559, %v759, 0.0
      %v764 = vadd.f32 %v762, %v763
      %v765 = vrot.slane %v764, 4
      %v766 = vadd.f32 %v764, %v765
      %v767 = vrot.slane %v766, 2
      %v768 = vadd.f32 %v766, %v767
      %v769 = vrot.slane %v768, 1
      %v770 = vadd.f32 %v768, %v769
      %v771 = vsel %vm559, %v760, 0.0
      %v772 = vsel %vm559, %v761, 0.0
      %v773 = vadd.f32 %v771, %v772
      %v774 = vrot.slane %v773, 4
      %v775 = vadd.f32 %v773, %v774
      %v776 = vrot.slane %v775, 2
      %v777 = vadd.f32 %v775, %v776
      %v778 = vrot.slane %v777, 1
      %v779 = vadd.f32 %v777, %v778
      %v780 = vxor.u32 %v573, 2147483648
      %v781 = vmul.f32 %v780, 1.442695
      %v782 = vpow.pop %v781
      %v783 = vadd.f32 %v782, 1.0
      %v784 = vrcp.pop %v783
      %v785 = vmul.f32 %v783, %v784
      %v786 = vsub.f32 1.0, %v785
      %v787 = vmul.f32 %v784, %v786
      %v788 = vadd.f32 %v784, %v787
      %vm789 = vweird.f32 %v783
      %vm790 = vweird.f32 %v784
      %vm791 = vmor %vm789, %vm790
      %v792 = vsel %vm791, %v784, %v788
      %v793 = vand.u32 2147483647, %v783
      %vm794 = vcmp.eq.f32.partialorder %v793, 8.507059e+37
      %v795 = vand.u32 %v783, 2147483648
      %v796 = vor.u32 1.1754944e-38, %v795
      %v797 = vsel %vm794, %v796, %v792
      %v798 = vmul.f32 1.0, %v797
      %v801 = vsel %vm656, %v779, %v770
      %802 = vrot.lane.b32.xlu0 %v801, 32
      %v803 = vpop.permute.xlu0 %802
      %v805 = vmul.f32 %v798, %v803
      %v806 = vld [vmem:[%s502] sm:$0x3]
      %808 = vrot.lane.b32.xlu0 %v573, 64
      %v809 = vpop.permute.xlu0 %808
      %810 = vrot.lane.b32.xlu0 %v586, 64
      %v811 = vpop.permute.xlu0 %810
      %vm812 = vcmask 523264
      %v813 = vsel %vm812, %v809, %v811
      %v815 = vadd.f32 %v806, %v813
      %v816 = vpack.c.bf16 %v805, %v805
      %v817 = vld [vmem:[%s7] sm:$0xf]
      %v818 = vld [vmem:[%s7 + $0x4] sm:$0xf]
      %v819 = vld [vmem:[%s7 + $0x8] sm:$0xf]
      %v820 = vld [vmem:[%s7 + $0xc] sm:$0xf]
      %822 = vrot.lane.b32.xlu0 %v816, 96
      %v823 = vpop.permute.xlu0 %822
      %v828 = vunpack.c.l.b16 %v817
      %v829 = vunpack.c.l.b16 %v818
      %v830 = vunpack.c.l.b16 %v819
      %v831 = vunpack.c.l.b16 %v820
      %v832 = vpack.c.b16 %v829, %v828
      %v833 = vpack.c.b16 %v831, %v830
      %v837 = vsel %vm559, %v823, 0
      %839 = vmatpush.bf16.msra.mxu0 0
      %840 = vmatpush.bf16.msra.mxu0 0
      %841 = vmatpush.bf16.msra.mxu0 0
      %842 = vmatpush.bf16.msra.mxu0 0
      %843 = vmatpush.bf16.msra.mxu0 0
      %844 = vmatpush.bf16.msra.mxu0 0
      %845 = vmatpush.bf16.msra.mxu0 %v833
      %846 = vmatpush.bf16.msra.mxu0 %v832
      %847 = vmatmul.bf16.gmra.mxu0 %v837
      %v848 = vpop.f32.mrf.mxu0
      %v849 = vadd.f32 0.0, %v848
      %v850 = vpop.f32.mrf.mxu0
      %851 = vdwg.mxu0
      %v852 = vadd.f32 %v815, %v849
      %v853 = vxor.u32 %v852, 2147483648
      %v854 = vmul.f32 %v853, 1.442695
      %v855 = vpow.pop %v854
      %v856 = vadd.f32 %v855, 1.0
      %v857 = vrcp.pop %v856
      %v858 = vmul.f32 %v856, %v857
      %v859 = vsub.f32 1.0, %v858
      %v860 = vmul.f32 %v857, %v859
      %v861 = vadd.f32 %v857, %v860
      %vm862 = vweird.f32 %v856
      %vm863 = vweird.f32 %v857
      %vm864 = vmor %vm862, %vm863
      %v865 = vsel %vm864, %v857, %v861
      %v866 = vand.u32 2147483647, %v856
      %vm867 = vcmp.eq.f32.partialorder %v866, 8.507059e+37
      %v868 = vand.u32 %v856, 2147483648
      %v869 = vor.u32 1.1754944e-38, %v868
      %v870 = vsel %vm867, %v869, %v865
      %v871 = vmul.f32 1.0, %v870
      %v872 = vtanh.pop %v852
      %874 = vrot.lane.b32.xlu0 %v527, 32
      %v875 = vpop.permute.xlu0 %874
      %v877 = vmul.f32 %v871, %v875
      %879 = vrot.lane.b32.xlu0 %v872, 64
      %v880 = vpop.permute.xlu0 %879
      %v882 = vmul.f32 %v871, %v880
      %884 = vrot.lane.b32.xlu0 %v882, 32
      %v885 = vpop.permute.xlu0 %884
      %v887 = vadd.f32 %v877, %v885
      %v888 = vtanh.pop %v887
      %890 = vrot.lane.b32.xlu0 %v888, 64
      %v891 = vpop.permute.xlu0 %890
      %v893 = vmul.f32 %v871, %v891
      %895 = vrot.lane.b32.xlu0 %v893, 32
      %v896 = vpop.permute.xlu0 %895
      %vm898 = vcmask 254976
      %899 = vst.msk [vmem:[#allocation2] sm:$0x3] %vm898, %v896
      %901 = vrot.lane.b32.xlu0 %v887, 96
      %v902 = vpop.permute.xlu0 %901
      %904 = vst.msk [vmem:[#allocation3] sm:$0x3] %vm898, %v902
      %v905 = vpack.c.bf16 %v893, %v893
      %v907 = vrot.slane %v905, 3
      %vm908 = vcmask 1040384
      %v911 = vsel %vm908, %v905, %v907
      %913 = vrot.lane.b32.xlu0 %v911, 32
      %v914 = vpop.permute.xlu0 %913
      %vm916 = vcmask 253952
      %917 = vst.msk [vmem:[%s508] sm:$0x1] %vm916, %v914
      %v918 = vperm.slane %v741, %v647
      %v919 = vperm.slane %v746, %v649
      %v920 = vsel %vm651, %v919, %v918
      %v921 = vperm.slane %v751, %v647
      %v922 = vperm.slane %v756, %v649
      %v923 = vsel %vm651, %v922, %v921
      %v924 = vsel %vm656, %v923, %v920
      %926 = vst.msk [vmem:[%s515] sm:$0x3] %vm659, %v924
      %p927 = scmp.lt.s32.totalorder %s30, 7
      %s928 = scalar_select %p927, %s30, 7
      %p929 = scmp.lt.s32.totalorder %s29, 0
      %s930 = scalar_select %p929, %s29, 0
      %s931 = sadd.s32 %s930, %s928
      %s932 = scalar_lea.vmem %s10, %s931
      %p933 = scmp.lt.s32.totalorder %s30, 7
      %s934 = scalar_select %p933, %s30, 7
      %p935 = scmp.lt.s32.totalorder %s29, 0
      %s936 = scalar_select %p935, %s29, 0
      %s937 = sadd.s32 %s936, %s934
      %s938 = smul.addr %s937, 2
      %s939 = scalar_lea.vmem %s11, %s938
      // Predicated region
      $region65: #{decoder_forward.2} parent=59 // pred_check
        %p940 = pneg %p294
      $region66: #{decoder_forward.2} parent=59 // pred_check_branch
        %942 = sbr.rel (%p940) target = $region68
      $region67: #{decoder_forward.2} parent=59 // pred_region
        _
      $region68: #{decoder_forward.2} parent=59 // pred_fallthru
        _
      // Predicated region
      $region69: #{decoder_forward.2} parent=59 // pred_check
        %p943 = pneg %p322
      $region70: #{decoder_forward.2} parent=59 // pred_check_branch
        %945 = sbr.rel (%p943) target = $region72
      $region71: #{decoder_forward.2} parent=59 // pred_region
        _
      $region72: #{decoder_forward.2} parent=59 // pred_fallthru
        _
    $region60: #{decoder_forward.2} parent=5 // pred_fallthru
      _
    %p946 = scmp.le.s32.totalorder 2, %s20
    // Predicated region
    $region73: #{decoder_forward.2} parent=5 // pred_check
      %p947 = pneg %p946
    $region74: #{decoder_forward.2} parent=5 // pred_check_branch
      %949 = sbr.rel (%p947) target = $region76
    $region75: #{decoder_forward.2} parent=5 // pred_region
      %s950 = ssub.s32 %s20, 2
      // Predicated region
      $region77: #{decoder_forward.2} parent=75 // pred_check
        %p951 = pneg %p300
      $region78: #{decoder_forward.2} parent=75 // pred_check_branch
        %953 = sbr.rel (%p951) target = $region80
      $region79: #{decoder_forward.2} parent=75 // pred_region
        %p954 = scmp.lt.s32.totalorder %s32, 7
        %s955 = scalar_select %p954, %s32, 7
        %p956 = scmp.lt.s32.totalorder %s31, 0
        %s957 = scalar_select %p956, %s31, 0
        %s958 = sadd.s32 %s957, %s955
        %s959 = scalar_lea.vmem %s10, %s958
      $region80: #{decoder_forward.2} parent=75 // pred_fallthru
        _
      // Predicated region
      $region81: #{decoder_forward.2} parent=75 // pred_check
        %p960 = pneg %p328
      $region82: #{decoder_forward.2} parent=75 // pred_check_branch
        %962 = sbr.rel (%p960) target = $region84
      $region83: #{decoder_forward.2} parent=75 // pred_region
        %p963 = scmp.lt.s32.totalorder %s32, 7
        %s964 = scalar_select %p963, %s32, 7
        %p965 = scmp.lt.s32.totalorder %s31, 0
        %s966 = scalar_select %p965, %s31, 0
        %s967 = sadd.s32 %s966, %s964
        %s968 = smul.addr %s967, 2
        %s969 = scalar_lea.vmem %s11, %s968
      $region84: #{decoder_forward.2} parent=75 // pred_fallthru
        _
    $region76: #{decoder_forward.2} parent=5 // pred_fallthru
      _
  $region6: #{decoder_forward.2} parent=0 // loop_footer
    %s24 = sadd.s32 1, %s20
  $region7: #{decoder_forward.2} parent=0 // loop_footer_branch
    %19 = sbr.rel target = $region3
  $region8: #{decoder_forward.2} parent=0 // loop_exit
    _

</llo_original>
